<compile_context>
chip_gen: v7x
topology: tpu7x:2x2x1
jax: 0.10.0
libtpu: 0.0.40
codegen_flags: <defaults>
</compile_context>

<pallas_src>
from functools import partial

import jax
import jax.numpy as jnp
from jax.experimental import pallas as pl
from jax.experimental.pallas import tpu as pltpu

BN_EPS = 1e-5
VMEM_LIMIT = 48 * 1024 * 1024  # < v7x physical 64 MiB; worst-case working set ~24 MiB


def _round_up(v, m):
    return (v + m - 1) // m * m


def _pad2(a, rows, cols):
    return jnp.pad(a, ((0, rows - a.shape[0]), (0, cols - a.shape[1])))


def _pick_tile(n_pad, cap):
    """Largest multiple of 128 <= cap that divides n_pad (n_pad is a 128-multiple)."""
    best, d = 128, 128
    while d <= min(cap, n_pad):
        if n_pad % d == 0:
            best = d
        d += 128
    return best


# ---------------------------------------------------------------------------
# Kernel 1: row-tiled reduction for the FIRST layer's BatchNorm batch statistics.
#   sum_ref / ssq_ref are resident [1, F] accumulators (constant block index).
# ---------------------------------------------------------------------------
def _bn_stats_kernel(x_ref, sum_ref, ssq_ref):
    @pl.when(pl.program_id(0) == 0)
    def _():
        sum_ref[...] = jnp.zeros_like(sum_ref)
        ssq_ref[...] = jnp.zeros_like(ssq_ref)

    x = x_ref[...]                                   # [TM, F_pad] f32 (pad rows are 0)
    sum_ref[...] += jnp.sum(x, axis=0, keepdims=True)
    ssq_ref[...] += jnp.sum(x * x, axis=0, keepdims=True)


def _bn_stats(x_p, tm):
    n_pad, f_pad = x_p.shape
    return pl.pallas_call(
        _bn_stats_kernel,
        out_shape=(jax.ShapeDtypeStruct((1, f_pad), jnp.float32),
                   jax.ShapeDtypeStruct((1, f_pad), jnp.float32)),
        grid=(n_pad // tm,),
        in_specs=[pl.BlockSpec((tm, f_pad), lambda i: (i, 0))],
        out_specs=(pl.BlockSpec((1, f_pad), lambda i: (0, 0)),
                   pl.BlockSpec((1, f_pad), lambda i: (0, 0))),
        compiler_params=pltpu.CompilerParams(
            dimension_semantics=("arbitrary",),
            vmem_limit_bytes=VMEM_LIMIT),
    )(x_p)


# ---------------------------------------------------------------------------
# Kernel 2: projection  Z = x(bf16) @ W_eff(bf16) + (shift @ W)   (computed ONCE)
# ---------------------------------------------------------------------------
def _proj_kernel(x_ref, w_ref, sw_ref, z_ref):
    xw = jnp.dot(x_ref[...], w_ref[...], preferred_element_type=jnp.float32)
    z_ref[...] = (xw + sw_ref[...]).astype(z_ref.dtype)


def _project(x_bf16, w_eff, sw, tm):
    n_pad, fin_pad = x_bf16.shape
    f_pad = w_eff.shape[1]
    return pl.pallas_call(
        _proj_kernel,
        out_shape=jax.ShapeDtypeStruct((n_pad, f_pad), jnp.bfloat16),
        grid=(n_pad // tm,),
        in_specs=[pl.BlockSpec((tm, fin_pad), lambda i: (i, 0)),      # x (bf16, streamed)
                  pl.BlockSpec((fin_pad, f_pad), lambda i: (0, 0)),   # W_eff (resident)
                  pl.BlockSpec((1, f_pad), lambda i: (0, 0))],        # shift @ W (resident)
        out_specs=pl.BlockSpec((tm, f_pad), lambda i: (i, 0)),
        compiler_params=pltpu.CompilerParams(
            dimension_semantics=("parallel",),
            vmem_limit_bytes=VMEM_LIMIT),
    )(x_bf16, w_eff, sw)


# ---------------------------------------------------------------------------
# Kernel 3: aggregation  Y[i-tile] = sum_k A_hat[i,k] @ Z[k] + b   (+ fused stats)
#   Accumulates directly in the resident f32 output block; at the last k step it
#   masks padded rows and emits per-i-tile partial BN statistics for the NEXT layer.
# ---------------------------------------------------------------------------
def _agg_kernel(a_ref, z_ref, b_ref, o_ref, sum_ref, ssq_ref, *, tm, nk, n_valid):
    k = pl.program_id(1)
    row0 = pl.program_id(0) * tm       # top-level program_id only (interpret-safe)

    @pl.when(k == 0)
    def _():
        o_ref[...] = jnp.zeros_like(o_ref)

    o_ref[...] += jnp.dot(a_ref[...], z_ref[...], preferred_element_type=jnp.float32)

    @pl.when(k == nk - 1)
    def _():
        rows = row0 + jax.lax.broadcasted_iota(jnp.int32, (tm, 1), 0)
        y = jnp.where(rows < n_valid, o_ref[...] + b_ref[...], 0.0)   # zero padded rows
        o_ref[...] = y
        sum_ref[...] = jnp.sum(y, axis=0, keepdims=True).reshape(sum_ref.shape)
        ssq_ref[...] = jnp.sum(y * y, axis=0, keepdims=True).reshape(ssq_ref.shape)


def _aggregate(a_bf16, z_bf16, b_p, n_actual, tm, tk):
    n_pad = a_bf16.shape[0]
    f_pad = z_bf16.shape[1]
    ni, nk = n_pad // tm, n_pad // tk
    kernel = partial(_agg_kernel, tm=tm, nk=nk, n_valid=n_actual)
    y, ps, pss = pl.pallas_call(
        kernel,
        out_shape=(jax.ShapeDtypeStruct((n_pad, f_pad), jnp.float32),
                   jax.ShapeDtypeStruct((ni, 1, f_pad), jnp.float32),
                   jax.ShapeDtypeStruct((ni, 1, f_pad), jnp.float32)),
        grid=(ni, nk),
        in_specs=[pl.BlockSpec((tm, tk), lambda i, k: (i, k)),        # A_hat bf16 (streamed)
                  pl.BlockSpec((tk, f_pad), lambda i, k: (k, 0)),     # Z bf16 (streamed)
                  pl.BlockSpec((1, f_pad), lambda i, k: (0, 0))],     # conv bias (resident)
        out_specs=(pl.BlockSpec((tm, f_pad), lambda i, k: (i, 0)),    # Y (resident accumulator)
                   pl.BlockSpec((1, 1, f_pad), lambda i, k: (i, 0, 0)),
                   pl.BlockSpec((1, 1, f_pad), lambda i, k: (i, 0, 0))),
        compiler_params=pltpu.CompilerParams(
            dimension_semantics=("parallel", "arbitrary"),
            vmem_limit_bytes=VMEM_LIMIT),
    )(a_bf16, z_bf16, b_p)
    # Reduce per-tile partial stats in XLA (tiny: [ni, 1, F]).
    return y, jnp.sum(ps, axis=0), jnp.sum(pss, axis=0)


# ---------------------------------------------------------------------------
# One fused BN + GCNConv layer (BN folded into the projection weight).
# ---------------------------------------------------------------------------
def gcn_layer(x_bf16, x_sum, x_ssq, gamma_p, beta_p, w_p, b_p, a_bf16,
              n_actual, tm, tk):
    fin_pad = w_p.shape[0]
    mean = x_sum / float(n_actual)
    var = jnp.maximum(x_ssq / float(n_actual) - mean * mean, 0.0)     # biased batch var
    scale = gamma_p * jax.lax.rsqrt(var + BN_EPS)                     # [1, fin_pad]
    shift = beta_p - mean * scale                                     # [1, fin_pad]
    w_eff = (w_p * scale.reshape(fin_pad, 1)).astype(jnp.bfloat16)    # diag(scale) @ W
    sw = shift @ w_p                                                  # [1, f_pad] f32
    z = _project(x_bf16, w_eff, sw, tm)                               # Z computed once
    return _aggregate(a_bf16, z, b_p, n_actual, tm, tk)               # y, sum, ssq (next BN)


# ---------------------------------------------------------------------------
# Plain-JAX glue: normalized adjacency + deterministic parameter init
# ---------------------------------------------------------------------------
def build_norm_adj(edge_index, num_nodes):
    """GCNConv.norm(): add self loops, deg^-1/2 A deg^-1/2, dense [N, N].
    Degrees are scattered over the source index (row), matching the gfn GCNConv."""
    loop = jnp.arange(num_nodes, dtype=edge_index.dtype)
    row = jnp.concatenate([edge_index[0], loop])   # source nodes (message x_j)
    col = jnp.concatenate([edge_index[1], loop])   # target nodes (aggregation index)
    ew = jnp.ones(row.shape[0], dtype=jnp.float32)
    deg = jnp.zeros((num_nodes,), jnp.float32).at[row].add(ew)
    dis = jnp.where(deg > 0.0, jax.lax.rsqrt(deg), 0.0)
    norm = dis[row] * ew * dis[col]
    a_hat = jnp.zeros((num_nodes, num_nodes), jnp.float32).at[col, row].add(norm)
    return a_hat


def glorot(key, fan_in, fan_out):
    limit = jnp.sqrt(6.0 / (fan_in + fan_out))
    return jax.random.uniform(key, (fan_in, fan_out), jnp.float32, -limit, limit)


def init_params(key, hidden_in, hidden, num_layers):
    keys = jax.random.split(key, num_layers + 1)
    return {
        # BatchNorm1d: weight=1, bias=1e-4 (reset_parameters); GCNConv: glorot W, zero b.
        "bn_feat": (jnp.ones((1, hidden_in), jnp.float32),
                    jnp.full((1, hidden_in), 1e-4, jnp.float32)),
        "conv_feat": (glorot(keys[0], hidden_in, hidden),
                      jnp.zeros((1, hidden), jnp.float32)),
        "bns_conv": [(jnp.ones((1, hidden), jnp.float32),
                      jnp.full((1, hidden), 1e-4, jnp.float32))
                     for _ in range(num_layers)],
        "convs": [(glorot(keys[i + 1], hidden, hidden),
                   jnp.zeros((1, hidden), jnp.float32))
                  for i in range(num_layers)],
    }


# ---------------------------------------------------------------------------
# Forward pass
# ---------------------------------------------------------------------------
def cline_fea_extract_forward(params, x, edge_index):
    n, fin = x.shape
    hidden = params["conv_feat"][0].shape[1]

    # Pad rows only to a 128-multiple (not to the row tile); features to 128.
    n_pad = _round_up(n, 128)
    fin_pad = _round_up(fin, 128)
    f_pad = _round_up(hidden, 128)

    # Tile plan: decoupled tm/tk; keep >=2 row tiles when possible (v7x has 2 TCs).
    tm = _pick_tile(n_pad, min(1024, max(128, n_pad // 2)))
    tk = _pick_tile(n_pad, 2048)

    a_hat = build_norm_adj(edge_index, n)                       # [n, n] f32
    a_bf16 = _pad2(a_hat, n_pad, n_pad).astype(jnp.bfloat16)    # halve HBM traffic
    # TODO(synk): on v7x, A_hat could be streamed as fp8 (e4m3) for another ~2x.

    x_p = _pad2(x.astype(jnp.float32), n_pad, fin_pad)
    x_sum, x_ssq = _bn_stats(x_p, tm)                           # layer-0 BN batch stats

    g, bt = params["bn_feat"]
    w, b = params["conv_feat"]
    y, s, ss = gcn_layer(x_p.astype(jnp.bfloat16), x_sum, x_ssq,
                         _pad2(g, 1, fin_pad), _pad2(bt, 1, fin_pad),
                         _pad2(w, fin_pad, f_pad), _pad2(b, 1, f_pad),
                         a_bf16, n, tm, tk)                      # bn_feat + conv_feat
    for (g, bt), (w, b) in zip(params["bns_conv"], params["convs"]):
        y, s, ss = gcn_layer(y.astype(jnp.bfloat16), s, ss,      # stats came fused from agg
                             _pad2(g, 1, f_pad), _pad2(bt, 1, f_pad),
                             _pad2(w, f_pad, f_pad), _pad2(b, 1, f_pad),
                             a_bf16, n, tm, tk)                  # bns_conv[i] + convs[i]
    return y[:n, :hidden]


def reference_forward(params, x, edge_index):
    """Pure-JAX f32 reference of the module forward (for a loose sanity check)."""
    a_hat = build_norm_adj(edge_index, x.shape[0])

    def bn(v, g, b):
        mu = jnp.mean(v, axis=0, keepdims=True)
        var = jnp.mean((v - mu) ** 2, axis=0, keepdims=True)
        return (v - mu) * jax.lax.rsqrt(var + BN_EPS) * g + b

    g, bt = params["bn_feat"]
    w, b = params["conv_feat"]
    y = a_hat @ (bn(x, g, bt) @ w) + b
    for (g, bt), (w, b) in zip(params["bns_conv"], params["convs"]):
        y = a_hat @ (bn(y, g, bt) @ w) + b
    return y


# ---------------------------------------------------------------------------
if __name__ == "__main__":
    key = jax.random.PRNGKey(0)
    k_feat, k_edge, k_param = jax.random.split(key, 3)

    num_nodes = 16
    num_edges = 40
    hidden_in = 32
    hidden = 32
    num_layers = 2

    x = jax.random.normal(k_feat, (num_nodes, hidden_in), jnp.float32)
    edge_index = jax.random.randint(k_edge, (2, num_edges), 0, num_nodes, jnp.int32)
    params = init_params(k_param, hidden_in, hidden, num_layers)

    fwd = jax.jit(cline_fea_extract_forward)
    out = jax.block_until_ready(fwd(params, x, edge_index))

    assert out.shape == (num_nodes, hidden)
    assert jnp.all(jnp.isfinite(out))

    # Loose check vs a pure-JAX f32 reference (kernel feeds the MXU bf16 inputs).
    ref = reference_forward(params, x, edge_index)
    rel = jnp.max(jnp.abs(out - ref)) / (jnp.max(jnp.abs(ref)) + 1e-6)
    assert rel < 0.1, f"relative error too large: {rel}"

    print("KERNEL_OK")
</pallas_src>

<mosaic_0001>
module attributes {stable_mosaic.version = 11 : i64} {
  func.func @_bn_stats_kernel(%arg0: i32, %arg1: memref<128x128xf32, #tpu.memory_space<vmem>>, %arg2: memref<1x128xf32, #tpu.memory_space<vmem>>, %arg3: memref<1x128xf32, #tpu.memory_space<vmem>>) attributes {dimension_semantics = [#tpu.dimension_semantics<arbitrary>], iteration_bounds = array<i64: 1>, scalar_prefetch = 0 : i64, scratch_operands = 0 : i64, tpu.core_type = #tpu.core_type<tc>, window_params = [{transform_indices = @transform_0, window_bounds = array<i64: 128, 128>}, {pipeline_mode = #tpu.pipeline_mode<synchronous>, transform_indices = @transform_1, window_bounds = array<i64: 1, 128>}, {pipeline_mode = #tpu.pipeline_mode<synchronous>, transform_indices = @transform_2, window_bounds = array<i64: 1, 128>}]} {
    %c0_i32 = arith.constant 0 : i32
    %0 = arith.cmpi eq, %arg0, %c0_i32 : i32
    %1 = arith.extui %0 : i1 to i32
    %c0_i32_0 = arith.constant 0 : i32
    %2 = arith.cmpi ne, %1, %c0_i32_0 : i32
    scf.if %2 {
      %cst_11 = arith.constant 0.000000e+00 : f32
      %15 = vector.broadcast %cst_11 : f32 to vector<1x128xf32>
      %c0_12 = arith.constant 0 : index
      %c0_13 = arith.constant 0 : index
      %16 = vector.load %arg2[%c0_12, %c0_13] : memref<1x128xf32, #tpu.memory_space<vmem>>, vector<1x128xf32>
      tpu.vector_store %arg2[%c0_12, %c0_13], %15 {strides = array<i32>} : memref<1x128xf32, #tpu.memory_space<vmem>>, vector<1x128xf32>,
      %cst_14 = arith.constant 0.000000e+00 : f32
      %17 = vector.broadcast %cst_14 : f32 to vector<1x128xf32>
      %c0_15 = arith.constant 0 : index
      %c0_16 = arith.constant 0 : index
      %18 = vector.load %arg3[%c0_15, %c0_16] : memref<1x128xf32, #tpu.memory_space<vmem>>, vector<1x128xf32>
      tpu.vector_store %arg3[%c0_15, %c0_16], %17 {strides = array<i32>} : memref<1x128xf32, #tpu.memory_space<vmem>>, vector<1x128xf32>,
    } else {
    }
    %c0 = arith.constant 0 : index
    %c0_1 = arith.constant 0 : index
    %3 = vector.load %arg1[%c0, %c0_1] : memref<128x128xf32, #tpu.memory_space<vmem>>, vector<128x128xf32>
    %c0_2 = arith.constant 0 : index
    %c0_3 = arith.constant 0 : index
    %4 = vector.load %arg2[%c0_2, %c0_3] : memref<1x128xf32, #tpu.memory_space<vmem>>, vector<1x128xf32>
    %cst = arith.constant dense<0.000000e+00> : vector<128xf32>
    %5 = vector.multi_reduction <add>, %3, %cst [0] : vector<128x128xf32> to vector<128xf32>
    %6 = vector.shape_cast %5 : vector<128xf32> to vector<1x128xf32>
    %7 = arith.addf %4, %6 : vector<1x128xf32>
    %c0_4 = arith.constant 0 : index
    %c0_5 = arith.constant 0 : index
    %8 = vector.load %arg2[%c0_4, %c0_5] : memref<1x128xf32, #tpu.memory_space<vmem>>, vector<1x128xf32>
    tpu.vector_store %arg2[%c0_4, %c0_5], %7 {strides = array<i32>} : memref<1x128xf32, #tpu.memory_space<vmem>>, vector<1x128xf32>,
    %c0_6 = arith.constant 0 : index
    %c0_7 = arith.constant 0 : index
    %9 = vector.load %arg3[%c0_6, %c0_7] : memref<1x128xf32, #tpu.memory_space<vmem>>, vector<1x128xf32>
    %10 = arith.mulf %3, %3 : vector<128x128xf32>
    %cst_8 = arith.constant dense<0.000000e+00> : vector<128xf32>
    %11 = vector.multi_reduction <add>, %10, %cst_8 [0] : vector<128x128xf32> to vector<128xf32>
    %12 = vector.shape_cast %11 : vector<128xf32> to vector<1x128xf32>
    %13 = arith.addf %9, %12 : vector<1x128xf32>
    %c0_9 = arith.constant 0 : index
    %c0_10 = arith.constant 0 : index
    %14 = vector.load %arg3[%c0_9, %c0_10] : memref<1x128xf32, #tpu.memory_space<vmem>>, vector<1x128xf32>
    tpu.vector_store %arg3[%c0_9, %c0_10], %13 {strides = array<i32>} : memref<1x128xf32, #tpu.memory_space<vmem>>, vector<1x128xf32>,
    return
  }
  func.func @transform_0(%arg0: i32) -> (i32, i32) {
    %c0_i32 = arith.constant 0 : i32
    %c0_i32_0 = arith.constant 0 : i32
    return %arg0, %c0_i32 : i32, i32
  }
  func.func @transform_1(%arg0: i32) -> (i32, i32) {
    %c0_i32 = arith.constant 0 : i32
    %c0_i32_0 = arith.constant 0 : i32
    %c0_i32_1 = arith.constant 0 : i32
    return %c0_i32, %c0_i32_0 : i32, i32
  }
  func.func @transform_2(%arg0: i32) -> (i32, i32) {
    %c0_i32 = arith.constant 0 : i32
    %c0_i32_0 = arith.constant 0 : i32
    %c0_i32_1 = arith.constant 0 : i32
    return %c0_i32, %c0_i32_0 : i32, i32
  }
}

module attributes {stable_mosaic.version = 11 : i64} {
  func.func @_proj_kernel(%arg0: i32, %arg1: memref<128x128xbf16, #tpu.memory_space<vmem>>, %arg2: memref<128x128xbf16, #tpu.memory_space<vmem>>, %arg3: memref<1x128xf32, #tpu.memory_space<vmem>>, %arg4: memref<128x128xbf16, #tpu.memory_space<vmem>>) attributes {dimension_semantics = [#tpu.dimension_semantics<parallel>], iteration_bounds = array<i64: 1>, scalar_prefetch = 0 : i64, scratch_operands = 0 : i64, tpu.core_type = #tpu.core_type<tc>, window_params = [{transform_indices = @transform_0, window_bounds = array<i64: 128, 128>}, {pipeline_mode = #tpu.pipeline_mode<synchronous>, transform_indices = @transform_1, window_bounds = array<i64: 128, 128>}, {pipeline_mode = #tpu.pipeline_mode<synchronous>, transform_indices = @transform_2, window_bounds = array<i64: 1, 128>}, {transform_indices = @transform_3, window_bounds = array<i64: 128, 128>}]} {
    %c0 = arith.constant 0 : index
    %c0_0 = arith.constant 0 : index
    %0 = vector.load %arg1[%c0, %c0_0] : memref<128x128xbf16, #tpu.memory_space<vmem>>, vector<128x128xbf16>
    %c0_1 = arith.constant 0 : index
    %c0_2 = arith.constant 0 : index
    %1 = vector.load %arg2[%c0_1, %c0_2] : memref<128x128xbf16, #tpu.memory_space<vmem>>, vector<128x128xbf16>
    %cst = arith.constant dense<0.000000e+00> : vector<128x128xf32>
    %2 = tpu.matmul %0, %1, %cst {dimension_numbers = #tpu.dot_dimension_numbers<[1], [0], [0], [1], [0, 0, 1, 1], [], []>} : vector<128x128xbf16>, vector<128x128xbf16>, vector<128x128xf32> -> vector<128x128xf32>
    %c0_3 = arith.constant 0 : index
    %c0_4 = arith.constant 0 : index
    %3 = vector.load %arg3[%c0_3, %c0_4] : memref<1x128xf32, #tpu.memory_space<vmem>>, vector<1x128xf32>
    %4 = vector.broadcast %3 : vector<1x128xf32> to vector<128x128xf32>
    %5 = arith.addf %2, %4 : vector<128x128xf32>
    %6 = arith.truncf %5 : vector<128x128xf32> to vector<128x128xbf16>
    %c0_5 = arith.constant 0 : index
    %c0_6 = arith.constant 0 : index
    %7 = vector.load %arg4[%c0_5, %c0_6] : memref<128x128xbf16, #tpu.memory_space<vmem>>, vector<128x128xbf16>
    tpu.vector_store %arg4[%c0_5, %c0_6], %6 {strides = array<i32>} : memref<128x128xbf16, #tpu.memory_space<vmem>>, vector<128x128xbf16>,
    return
  }
  func.func @transform_0(%arg0: i32) -> (i32, i32) {
    %c0_i32 = arith.constant 0 : i32
    %c0_i32_0 = arith.constant 0 : i32
    return %arg0, %c0_i32 : i32, i32
  }
  func.func @transform_1(%arg0: i32) -> (i32, i32) {
    %c0_i32 = arith.constant 0 : i32
    %c0_i32_0 = arith.constant 0 : i32
    %c0_i32_1 = arith.constant 0 : i32
    return %c0_i32, %c0_i32_0 : i32, i32
  }
  func.func @transform_2(%arg0: i32) -> (i32, i32) {
    %c0_i32 = arith.constant 0 : i32
    %c0_i32_0 = arith.constant 0 : i32
    %c0_i32_1 = arith.constant 0 : i32
    return %c0_i32, %c0_i32_0 : i32, i32
  }
  func.func @transform_3(%arg0: i32) -> (i32, i32) {
    %c0_i32 = arith.constant 0 : i32
    %c0_i32_0 = arith.constant 0 : i32
    return %arg0, %c0_i32 : i32, i32
  }
}

module attributes {stable_mosaic.version = 11 : i64} {
  func.func @_agg_kernel(%arg0: i32, %arg1: i32, %arg2: memref<128x128xbf16, #tpu.memory_space<vmem>>, %arg3: memref<128x128xbf16, #tpu.memory_space<vmem>>, %arg4: memref<1x128xf32, #tpu.memory_space<vmem>>, %arg5: memref<128x128xf32, #tpu.memory_space<vmem>>, %arg6: memref<1x1x128xf32, #tpu.memory_space<vmem>>, %arg7: memref<1x1x128xf32, #tpu.memory_space<vmem>>) attributes {dimension_semantics = [#tpu.dimension_semantics<parallel>, #tpu.dimension_semantics<arbitrary>], iteration_bounds = array<i64: 1, 1>, scalar_prefetch = 0 : i64, scratch_operands = 0 : i64, tpu.core_type = #tpu.core_type<tc>, window_params = [{transform_indices = @transform_0, window_bounds = array<i64: 128, 128>}, {transform_indices = @transform_1, window_bounds = array<i64: 128, 128>}, {pipeline_mode = #tpu.pipeline_mode<synchronous>, transform_indices = @transform_2, window_bounds = array<i64: 1, 128>}, {transform_indices = @transform_3, window_bounds = array<i64: 128, 128>}, {transform_indices = @transform_4, window_bounds = array<i64: 1, 1, 128>}, {transform_indices = @transform_5, window_bounds = array<i64: 1, 1, 128>}]} {
    %c128_i32 = arith.constant 128 : i32
    %0 = arith.muli %arg0, %c128_i32 : i32
    %c0_i32 = arith.constant 0 : i32
    %1 = arith.cmpi eq, %arg1, %c0_i32 : i32
    %2 = arith.extui %1 : i1 to i32
    %c0_i32_0 = arith.constant 0 : i32
    %3 = arith.cmpi ne, %2, %c0_i32_0 : i32
    scf.if %3 {
      %cst_10 = arith.constant 0.000000e+00 : f32
      %13 = vector.broadcast %cst_10 : f32 to vector<128x128xf32>
      %c0_11 = arith.constant 0 : index
      %c0_12 = arith.constant 0 : index
      %14 = vector.load %arg5[%c0_11, %c0_12] : memref<128x128xf32, #tpu.memory_space<vmem>>, vector<128x128xf32>
      tpu.vector_store %arg5[%c0_11, %c0_12], %13 {strides = array<i32>} : memref<128x128xf32, #tpu.memory_space<vmem>>, vector<128x128xf32>,
    } else {
    }
    %c0 = arith.constant 0 : index
    %c0_1 = arith.constant 0 : index
    %4 = vector.load %arg5[%c0, %c0_1] : memref<128x128xf32, #tpu.memory_space<vmem>>, vector<128x128xf32>
    %c0_2 = arith.constant 0 : index
    %c0_3 = arith.constant 0 : index
    %5 = vector.load %arg2[%c0_2, %c0_3] : memref<128x128xbf16, #tpu.memory_space<vmem>>, vector<128x128xbf16>
    %c0_4 = arith.constant 0 : index
    %c0_5 = arith.constant 0 : index
    %6 = vector.load %arg3[%c0_4, %c0_5] : memref<128x128xbf16, #tpu.memory_space<vmem>>, vector<128x128xbf16>
    %cst = arith.constant dense<0.000000e+00> : vector<128x128xf32>
    %7 = tpu.matmul %5, %6, %cst {dimension_numbers = #tpu.dot_dimension_numbers<[1], [0], [0], [1], [0, 0, 1, 1], [], []>} : vector<128x128xbf16>, vector<128x128xbf16>, vector<128x128xf32> -> vector<128x128xf32>
    %8 = arith.addf %4, %7 : vector<128x128xf32>
    %c0_6 = arith.constant 0 : index
    %c0_7 = arith.constant 0 : index
    %9 = vector.load %arg5[%c0_6, %c0_7] : memref<128x128xf32, #tpu.memory_space<vmem>>, vector<128x128xf32>
    tpu.vector_store %arg5[%c0_6, %c0_7], %8 {strides = array<i32>} : memref<128x128xf32, #tpu.memory_space<vmem>>, vector<128x128xf32>,
    %c0_i32_8 = arith.constant 0 : i32
    %10 = arith.cmpi eq, %arg1, %c0_i32_8 : i32
    %11 = arith.extui %10 : i1 to i32
    %c0_i32_9 = arith.constant 0 : i32
    %12 = arith.cmpi ne, %11, %c0_i32_9 : i32
    scf.if %12 {
      %13 = tpu.iota {dimensions = array<i32: 0>} : vector<128x1xi32>
      %14 = vector.broadcast %0 : i32 to vector<128x1xi32>
      %15 = arith.addi %14, %13 : vector<128x1xi32>
      %c16_i32 = arith.constant 16 : i32
      %16 = vector.broadcast %c16_i32 : i32 to vector<128x1xi32>
      %17 = arith.cmpi slt, %15, %16 : vector<128x1xi32>
      %c0_10 = arith.constant 0 : index
      %c0_11 = arith.constant 0 : index
      %18 = vector.load %arg5[%c0_10, %c0_11] : memref<128x128xf32, #tpu.memory_space<vmem>>, vector<128x128xf32>
      %c0_12 = arith.constant 0 : index
      %c0_13 = arith.constant 0 : index
      %19 = vector.load %arg4[%c0_12, %c0_13] : memref<1x128xf32, #tpu.memory_space<vmem>>, vector<1x128xf32>
      %20 = vector.broadcast %19 : vector<1x128xf32> to vector<128x128xf32>
      %21 = arith.addf %18, %20 : vector<128x128xf32>
      %cst_14 = arith.constant 0.000000e+00 : f32
      %22 = vector.shape_cast %17 : vector<128x1xi1> to vector<128x1xi1>
      %23 = vector.broadcast %22 : vector<128x1xi1> to vector<128x128xi1>
      %24 = vector.broadcast %cst_14 : f32 to vector<128x128xf32>
      %25 = arith.select %23, %21, %24 : vector<128x128xi1>, vector<128x128xf32>
      %c0_15 = arith.constant 0 : index
      %c0_16 = arith.constant 0 : index
      %26 = vector.load %arg5[%c0_15, %c0_16] : memref<128x128xf32, #tpu.memory_space<vmem>>, vector<128x128xf32>
      tpu.vector_store %arg5[%c0_15, %c0_16], %25 {strides = array<i32>} : memref<128x128xf32, #tpu.memory_space<vmem>>, vector<128x128xf32>,
      %cst_17 = arith.constant dense<0.000000e+00> : vector<128xf32>
      %27 = vector.multi_reduction <add>, %25, %cst_17 [0] : vector<128x128xf32> to vector<128xf32>
      %28 = vector.shape_cast %27 : vector<128xf32> to vector<1x128xf32>
      %29 = vector.shape_cast %28 : vector<1x128xf32> to vector<1x1x128xf32>
      %c0_18 = arith.constant 0 : index
      %c0_19 = arith.constant 0 : index
      %c0_20 = arith.constant 0 : index
      %30 = vector.load %arg6[%c0_18, %c0_19, %c0_20] : memref<1x1x128xf32, #tpu.memory_space<vmem>>, vector<1x1x128xf32>
      tpu.vector_store %arg6[%c0_18, %c0_19, %c0_20], %29 {strides = array<i32>} : memref<1x1x128xf32, #tpu.memory_space<vmem>>, vector<1x1x128xf32>,
      %31 = arith.mulf %25, %25 : vector<128x128xf32>
      %cst_21 = arith.constant dense<0.000000e+00> : vector<128xf32>
      %32 = vector.multi_reduction <add>, %31, %cst_21 [0] : vector<128x128xf32> to vector<128xf32>
      %33 = vector.shape_cast %32 : vector<128xf32> to vector<1x128xf32>
      %34 = vector.shape_cast %33 : vector<1x128xf32> to vector<1x1x128xf32>
      %c0_22 = arith.constant 0 : index
      %c0_23 = arith.constant 0 : index
      %c0_24 = arith.constant 0 : index
      %35 = vector.load %arg7[%c0_22, %c0_23, %c0_24] : memref<1x1x128xf32, #tpu.memory_space<vmem>>, vector<1x1x128xf32>
      tpu.vector_store %arg7[%c0_22, %c0_23, %c0_24], %34 {strides = array<i32>} : memref<1x1x128xf32, #tpu.memory_space<vmem>>, vector<1x1x128xf32>,
    } else {
    }
    return
  }
  func.func @transform_0(%arg0: i32, %arg1: i32) -> (i32, i32) {
    %c0_i32 = arith.constant 0 : i32
    return %arg0, %arg1 : i32, i32
  }
  func.func @transform_1(%arg0: i32, %arg1: i32) -> (i32, i32) {
    %c0_i32 = arith.constant 0 : i32
    %c0_i32_0 = arith.constant 0 : i32
    return %arg1, %c0_i32 : i32, i32
  }
  func.func @transform_2(%arg0: i32, %arg1: i32) -> (i32, i32) {
    %c0_i32 = arith.constant 0 : i32
    %c0_i32_0 = arith.constant 0 : i32
    %c0_i32_1 = arith.constant 0 : i32
    return %c0_i32, %c0_i32_0 : i32, i32
  }
  func.func @transform_3(%arg0: i32, %arg1: i32) -> (i32, i32) {
    %c0_i32 = arith.constant 0 : i32
    %c0_i32_0 = arith.constant 0 : i32
    return %arg0, %c0_i32 : i32, i32
  }
  func.func @transform_4(%arg0: i32, %arg1: i32) -> (i32, i32, i32) {
    %c0_i32 = arith.constant 0 : i32
    %c0_i32_0 = arith.constant 0 : i32
    %c0_i32_1 = arith.constant 0 : i32
    return %arg0, %c0_i32, %c0_i32_0 : i32, i32, i32
  }
  func.func @transform_5(%arg0: i32, %arg1: i32) -> (i32, i32, i32) {
    %c0_i32 = arith.constant 0 : i32
    %c0_i32_0 = arith.constant 0 : i32
    %c0_i32_1 = arith.constant 0 : i32
    return %arg0, %c0_i32, %c0_i32_0 : i32, i32, i32
  }
}

module attributes {stable_mosaic.version = 11 : i64} {
  func.func @_agg_kernel(%arg0: i32, %arg1: i32, %arg2: memref<128x128xbf16, #tpu.memory_space<vmem>>, %arg3: memref<128x128xbf16, #tpu.memory_space<vmem>>, %arg4: memref<1x128xf32, #tpu.memory_space<vmem>>, %arg5: memref<128x128xf32, #tpu.memory_space<vmem>>, %arg6: memref<1x1x128xf32, #tpu.memory_space<vmem>>, %arg7: memref<1x1x128xf32, #tpu.memory_space<vmem>>) attributes {dimension_semantics = [#tpu.dimension_semantics<parallel>, #tpu.dimension_semantics<arbitrary>], iteration_bounds = array<i64: 1, 1>, scalar_prefetch = 0 : i64, scratch_operands = 0 : i64, tpu.core_type = #tpu.core_type<tc>, window_params = [{transform_indices = @transform_0, window_bounds = array<i64: 128, 128>}, {transform_indices = @transform_1, window_bounds = array<i64: 128, 128>}, {pipeline_mode = #tpu.pipeline_mode<synchronous>, transform_indices = @transform_2, window_bounds = array<i64: 1, 128>}, {transform_indices = @transform_3, window_bounds = array<i64: 128, 128>}, {transform_indices = @transform_4, window_bounds = array<i64: 1, 1, 128>}, {transform_indices = @transform_5, window_bounds = array<i64: 1, 1, 128>}]} {
    %c128_i32 = arith.constant 128 : i32
    %0 = arith.muli %arg0, %c128_i32 : i32
    %c0_i32 = arith.constant 0 : i32
    %1 = arith.cmpi eq, %arg1, %c0_i32 : i32
    %2 = arith.extui %1 : i1 to i32
    %c0_i32_0 = arith.constant 0 : i32
    %3 = arith.cmpi ne, %2, %c0_i32_0 : i32
    scf.if %3 {
      %cst_10 = arith.constant 0.000000e+00 : f32
      %13 = vector.broadcast %cst_10 : f32 to vector<128x128xf32>
      %c0_11 = arith.constant 0 : index
      %c0_12 = arith.constant 0 : index
      %14 = vector.load %arg5[%c0_11, %c0_12] : memref<128x128xf32, #tpu.memory_space<vmem>>, vector<128x128xf32>
      tpu.vector_store %arg5[%c0_11, %c0_12], %13 {strides = array<i32>} : memref<128x128xf32, #tpu.memory_space<vmem>>, vector<128x128xf32>,
    } else {
    }
    %c0 = arith.constant 0 : index
    %c0_1 = arith.constant 0 : index
    %4 = vector.load %arg5[%c0, %c0_1] : memref<128x128xf32, #tpu.memory_space<vmem>>, vector<128x128xf32>
    %c0_2 = arith.constant 0 : index
    %c0_3 = arith.constant 0 : index
    %5 = vector.load %arg2[%c0_2, %c0_3] : memref<128x128xbf16, #tpu.memory_space<vmem>>, vector<128x128xbf16>
    %c0_4 = arith.constant 0 : index
    %c0_5 = arith.constant 0 : index
    %6 = vector.load %arg3[%c0_4, %c0_5] : memref<128x128xbf16, #tpu.memory_space<vmem>>, vector<128x128xbf16>
    %cst = arith.constant dense<0.000000e+00> : vector<128x128xf32>
    %7 = tpu.matmul %5, %6, %cst {dimension_numbers = #tpu.dot_dimension_numbers<[1], [0], [0], [1], [0, 0, 1, 1], [], []>} : vector<128x128xbf16>, vector<128x128xbf16>, vector<128x128xf32> -> vector<128x128xf32>
    %8 = arith.addf %4, %7 : vector<128x128xf32>
    %c0_6 = arith.constant 0 : index
    %c0_7 = arith.constant 0 : index
    %9 = vector.load %arg5[%c0_6, %c0_7] : memref<128x128xf32, #tpu.memory_space<vmem>>, vector<128x128xf32>
    tpu.vector_store %arg5[%c0_6, %c0_7], %8 {strides = array<i32>} : memref<128x128xf32, #tpu.memory_space<vmem>>, vector<128x128xf32>,
    %c0_i32_8 = arith.constant 0 : i32
    %10 = arith.cmpi eq, %arg1, %c0_i32_8 : i32
    %11 = arith.extui %10 : i1 to i32
    %c0_i32_9 = arith.constant 0 : i32
    %12 = arith.cmpi ne, %11, %c0_i32_9 : i32
    scf.if %12 {
      %13 = tpu.iota {dimensions = array<i32: 0>} : vector<128x1xi32>
      %14 = vector.broadcast %0 : i32 to vector<128x1xi32>
      %15 = arith.addi %14, %13 : vector<128x1xi32>
      %c16_i32 = arith.constant 16 : i32
      %16 = vector.broadcast %c16_i32 : i32 to vector<128x1xi32>
      %17 = arith.cmpi slt, %15, %16 : vector<128x1xi32>
      %c0_10 = arith.constant 0 : index
      %c0_11 = arith.constant 0 : index
      %18 = vector.load %arg5[%c0_10, %c0_11] : memref<128x128xf32, #tpu.memory_space<vmem>>, vector<128x128xf32>
      %c0_12 = arith.constant 0 : index
      %c0_13 = arith.constant 0 : index
      %19 = vector.load %arg4[%c0_12, %c0_13] : memref<1x128xf32, #tpu.memory_space<vmem>>, vector<1x128xf32>
      %20 = vector.broadcast %19 : vector<1x128xf32> to vector<128x128xf32>
      %21 = arith.addf %18, %20 : vector<128x128xf32>
      %cst_14 = arith.constant 0.000000e+00 : f32
      %22 = vector.shape_cast %17 : vector<128x1xi1> to vector<128x1xi1>
      %23 = vector.broadcast %22 : vector<128x1xi1> to vector<128x128xi1>
      %24 = vector.broadcast %cst_14 : f32 to vector<128x128xf32>
      %25 = arith.select %23, %21, %24 : vector<128x128xi1>, vector<128x128xf32>
      %c0_15 = arith.constant 0 : index
      %c0_16 = arith.constant 0 : index
      %26 = vector.load %arg5[%c0_15, %c0_16] : memref<128x128xf32, #tpu.memory_space<vmem>>, vector<128x128xf32>
      tpu.vector_store %arg5[%c0_15, %c0_16], %25 {strides = array<i32>} : memref<128x128xf32, #tpu.memory_space<vmem>>, vector<128x128xf32>,
      %cst_17 = arith.constant dense<0.000000e+00> : vector<128xf32>
      %27 = vector.multi_reduction <add>, %25, %cst_17 [0] : vector<128x128xf32> to vector<128xf32>
      %28 = vector.shape_cast %27 : vector<128xf32> to vector<1x128xf32>
      %29 = vector.shape_cast %28 : vector<1x128xf32> to vector<1x1x128xf32>
      %c0_18 = arith.constant 0 : index
      %c0_19 = arith.constant 0 : index
      %c0_20 = arith.constant 0 : index
      %30 = vector.load %arg6[%c0_18, %c0_19, %c0_20] : memref<1x1x128xf32, #tpu.memory_space<vmem>>, vector<1x1x128xf32>
      tpu.vector_store %arg6[%c0_18, %c0_19, %c0_20], %29 {strides = array<i32>} : memref<1x1x128xf32, #tpu.memory_space<vmem>>, vector<1x1x128xf32>,
      %31 = arith.mulf %25, %25 : vector<128x128xf32>
      %cst_21 = arith.constant dense<0.000000e+00> : vector<128xf32>
      %32 = vector.multi_reduction <add>, %31, %cst_21 [0] : vector<128x128xf32> to vector<128xf32>
      %33 = vector.shape_cast %32 : vector<128xf32> to vector<1x128xf32>
      %34 = vector.shape_cast %33 : vector<1x128xf32> to vector<1x1x128xf32>
      %c0_22 = arith.constant 0 : index
      %c0_23 = arith.constant 0 : index
      %c0_24 = arith.constant 0 : index
      %35 = vector.load %arg7[%c0_22, %c0_23, %c0_24] : memref<1x1x128xf32, #tpu.memory_space<vmem>>, vector<1x1x128xf32>
      tpu.vector_store %arg7[%c0_22, %c0_23, %c0_24], %34 {strides = array<i32>} : memref<1x1x128xf32, #tpu.memory_space<vmem>>, vector<1x1x128xf32>,
    } else {
    }
    return
  }
  func.func @transform_0(%arg0: i32, %arg1: i32) -> (i32, i32) {
    %c0_i32 = arith.constant 0 : i32
    return %arg0, %arg1 : i32, i32
  }
  func.func @transform_1(%arg0: i32, %arg1: i32) -> (i32, i32) {
    %c0_i32 = arith.constant 0 : i32
    %c0_i32_0 = arith.constant 0 : i32
    return %arg1, %c0_i32 : i32, i32
  }
  func.func @transform_2(%arg0: i32, %arg1: i32) -> (i32, i32) {
    %c0_i32 = arith.constant 0 : i32
    %c0_i32_0 = arith.constant 0 : i32
    %c0_i32_1 = arith.constant 0 : i32
    return %c0_i32, %c0_i32_0 : i32, i32
  }
  func.func @transform_3(%arg0: i32, %arg1: i32) -> (i32, i32) {
    %c0_i32 = arith.constant 0 : i32
    %c0_i32_0 = arith.constant 0 : i32
    return %arg0, %c0_i32 : i32, i32
  }
  func.func @transform_4(%arg0: i32, %arg1: i32) -> (i32, i32, i32) {
    %c0_i32 = arith.constant 0 : i32
    %c0_i32_0 = arith.constant 0 : i32
    %c0_i32_1 = arith.constant 0 : i32
    return %arg0, %c0_i32, %c0_i32_0 : i32, i32, i32
  }
  func.func @transform_5(%arg0: i32, %arg1: i32) -> (i32, i32, i32) {
    %c0_i32 = arith.constant 0 : i32
    %c0_i32_0 = arith.constant 0 : i32
    %c0_i32_1 = arith.constant 0 : i32
    return %arg0, %c0_i32, %c0_i32_0 : i32, i32, i32
  }
}

</mosaic_0001>

<llo_original>
// kernel: mul.22
$region0: #{mul.22}
  #allocation0 [shape = 's32[1]{0}', space=sflag, size = 0x4, scoped, tag = 'scoped memory for mul.22']
  %s0 = inlined_call_operand.vmem [shape: f32[56], index: 0, kind: input, shape index: {}]
  %s1 = inlined_call_operand.vmem [shape: f32[56], index: 1, kind: input, shape index: {}]
  %s2 = inlined_call_operand.vmem [shape: f32[56], index: 2, kind: output, shape index: {}]
  %v3 = vld [vmem:[%s0] sm:$0x1]
  %v4 = vld [vmem:[%s1] sm:$0x1]
  %5 = xla_tuple %v3, %v4
  %6 = xla_tuple %5
  %v7 = vmul.f32 %v3, %v4
  %8 = xla_tuple %v7
  %9 = vst [vmem:[%s2] sm:$0x1] %v7

// kernel: cline_fea_extract_forward.7
$region0: #{cline_fea_extract_forward.7}
  #allocation0 [shape = 'u32[]', space=smem, size = 0x4, offset = 0x4, fixed_abs, tag = 'smem constant byte address 0x4 - core index']
  #allocation1 [shape = 'u32[144,128]{1,0:T(1,128)}', space=vmem, size = 0x12000, scoped, tag = 'internal scratch']
  %s0 = inlined_call_operand.vmem [shape: f32[128,128], index: 0, kind: input, shape index: {}]
  %s1 = inlined_call_operand.vmem [shape: f32[1,128], index: 1, kind: output, shape index: {0}]
  %s2 = inlined_call_operand.vmem [shape: f32[1,128], index: 2, kind: output, shape index: {1}]
  %3 = xla_tuple %s1, %s2
  %s4 = sld [smem:[#allocation0]]
  $region26: #{cline_fea_extract_forward.7} parent=0
    _
  %s6 = ssub.s32 1, %s4
  %s7 = scalar_select 0, %s6, %s4
  // Predicated region
  $region2: #{cline_fea_extract_forward.7} parent=0 // pred_check
    _
  $region3: #{cline_fea_extract_forward.7} parent=0 // pred_check_branch
    %9 = sbr.rel (0) target = $region5
  $region4: #{cline_fea_extract_forward.7} parent=0 // pred_region
    _
  $region5: #{cline_fea_extract_forward.7} parent=0 // pred_fallthru
    _
  %p10 = scmp.eq.s32.totalorder 0, 0
  // Predicated region
  $region6: #{cline_fea_extract_forward.7} parent=0 // pred_check
    %p11 = pneg %p10
  $region7: #{cline_fea_extract_forward.7} parent=0 // pred_check_branch
    %13 = sbr.rel (%p11) target = $region9
  $region8: #{cline_fea_extract_forward.7} parent=0 // pred_region
    %14 = vst [vmem:[%s1] sm:$0x1] 0.0
    %15 = vst [vmem:[%s2] sm:$0x1] 0.0
  $region9: #{cline_fea_extract_forward.7} parent=0 // pred_fallthru
    _
  %v16 = vld [vmem:[%s0] sm:$0xff]
  %v17 = vld [vmem:[%s0 + $0x8] sm:$0xff]
  %v18 = vld [vmem:[%s0 + $0x10] sm:$0xff]
  %v19 = vld [vmem:[%s0 + $0x18] sm:$0xff]
  %v20 = vld [vmem:[%s0 + $0x20] sm:$0xff]
  %v21 = vld [vmem:[%s0 + $0x28] sm:$0xff]
  %v22 = vld [vmem:[%s0 + $0x30] sm:$0xff]
  %v23 = vld [vmem:[%s0 + $0x38] sm:$0xff]
  %v24 = vld [vmem:[%s0 + $0x40] sm:$0xff]
  %v25 = vld [vmem:[%s0 + $0x48] sm:$0xff]
  %v26 = vld [vmem:[%s0 + $0x50] sm:$0xff]
  %v27 = vld [vmem:[%s0 + $0x58] sm:$0xff]
  %v28 = vld [vmem:[%s0 + $0x60] sm:$0xff]
  %v29 = vld [vmem:[%s0 + $0x68] sm:$0xff]
  %v30 = vld [vmem:[%s0 + $0x70] sm:$0xff]
  %v31 = vld [vmem:[%s0 + $0x78] sm:$0xff]
  %v32 = vld [vmem:[%s1] sm:$0x1]
  %v33 = vadd.f32 %v16, %v17
  %v34 = vadd.f32 %v33, %v18
  %v35 = vadd.f32 %v34, %v19
  %v36 = vadd.f32 %v35, %v20
  %v37 = vadd.f32 %v36, %v21
  %v38 = vadd.f32 %v37, %v22
  %v39 = vadd.f32 %v38, %v23
  %v40 = vadd.f32 %v39, %v24
  %v41 = vadd.f32 %v40, %v25
  %v42 = vadd.f32 %v41, %v26
  %v43 = vadd.f32 %v42, %v27
  %v44 = vadd.f32 %v43, %v28
  %v45 = vadd.f32 %v44, %v29
  %v46 = vadd.f32 %v45, %v30
  %v47 = vadd.f32 %v46, %v31
  %v48 = vrot.slane %v47, 4
  %v49 = vadd.f32 %v47, %v48
  %v50 = vrot.slane %v49, 2
  %v51 = vadd.f32 %v49, %v50
  %v52 = vrot.slane %v51, 1
  %v53 = vadd.f32 %v51, %v52
  %v54 = vadd.f32 %v32, %v53
  %55 = vst [vmem:[%s1] sm:$0x1] %v54
  %v56 = vld [vmem:[%s2] sm:$0x1]
  %v57 = vmul.f32 %v16, %v16
  %v58 = vmul.f32 %v17, %v17
  %v59 = vmul.f32 %v18, %v18
  %v60 = vmul.f32 %v19, %v19
  %v61 = vmul.f32 %v20, %v20
  %v62 = vmul.f32 %v21, %v21
  %v63 = vmul.f32 %v22, %v22
  %v64 = vmul.f32 %v23, %v23
  %v65 = vmul.f32 %v24, %v24
  %v66 = vmul.f32 %v25, %v25
  %v67 = vmul.f32 %v26, %v26
  %v68 = vmul.f32 %v27, %v27
  %v69 = vmul.f32 %v28, %v28
  %v70 = vmul.f32 %v29, %v29
  %v71 = vmul.f32 %v30, %v30
  %v72 = vmul.f32 %v31, %v31
  %v73 = vadd.f32 %v57, %v58
  %v74 = vadd.f32 %v73, %v59
  %v75 = vadd.f32 %v74, %v60
  %v76 = vadd.f32 %v75, %v61
  %v77 = vadd.f32 %v76, %v62
  %v78 = vadd.f32 %v77, %v63
  %v79 = vadd.f32 %v78, %v64
  %v80 = vadd.f32 %v79, %v65
  %v81 = vadd.f32 %v80, %v66
  %v82 = vadd.f32 %v81, %v67
  %v83 = vadd.f32 %v82, %v68
  %v84 = vadd.f32 %v83, %v69
  %v85 = vadd.f32 %v84, %v70
  %v86 = vadd.f32 %v85, %v71
  %v87 = vadd.f32 %v86, %v72
  %v88 = vrot.slane %v87, 4
  %v89 = vadd.f32 %v87, %v88
  %v90 = vrot.slane %v89, 2
  %v91 = vadd.f32 %v89, %v90
  %v92 = vrot.slane %v91, 1
  %v93 = vadd.f32 %v91, %v92
  %v94 = vadd.f32 %v56, %v93
  %95 = vst [vmem:[%s2] sm:$0x1] %v94
  // Predicated region
  $region10: #{cline_fea_extract_forward.7} parent=0 // pred_check
    _
  $region11: #{cline_fea_extract_forward.7} parent=0 // pred_check_branch
    %97 = sbr.rel (0) target = $region13
  $region12: #{cline_fea_extract_forward.7} parent=0 // pred_region
    _
  $region13: #{cline_fea_extract_forward.7} parent=0 // pred_fallthru
    _
  // Predicated region
  $region14: #{cline_fea_extract_forward.7} parent=0 // pred_check
    _
  $region15: #{cline_fea_extract_forward.7} parent=0 // pred_check_branch
    %99 = sbr.rel (0) target = $region17
  $region16: #{cline_fea_extract_forward.7} parent=0 // pred_region
    _
  $region17: #{cline_fea_extract_forward.7} parent=0 // pred_fallthru
    _
  // Predicated region
  $region18: #{cline_fea_extract_forward.7} parent=0 // pred_check
    _
  $region19: #{cline_fea_extract_forward.7} parent=0 // pred_check_branch
    %101 = sbr.rel (0) target = $region21
  $region20: #{cline_fea_extract_forward.7} parent=0 // pred_region
    _
  $region21: #{cline_fea_extract_forward.7} parent=0 // pred_fallthru
    _
  // Predicated region
  $region22: #{cline_fea_extract_forward.7} parent=0 // pred_check
    _
  $region23: #{cline_fea_extract_forward.7} parent=0 // pred_check_branch
    %103 = sbr.rel (0) target = $region25
  $region24: #{cline_fea_extract_forward.7} parent=0 // pred_region
    _
  $region25: #{cline_fea_extract_forward.7} parent=0 // pred_fallthru
    _

// kernel: cline_fea_extract_forward.8
$region0: #{cline_fea_extract_forward.8}
  #allocation0 [shape = 'u32[]', space=smem, size = 0x4, offset = 0x4, fixed_abs, tag = 'smem constant byte address 0x4 - core index']
  #allocation1 [shape = 'u32[144,128]{1,0:T(1,128)}', space=vmem, size = 0x12000, scoped, tag = 'internal scratch']
  %s0 = inlined_call_operand.vmem [shape: bf16[128,128], index: 0, kind: input, shape index: {}]
  %s1 = inlined_call_operand.vmem [shape: bf16[128,128], index: 1, kind: input, shape index: {}]
  %s2 = inlined_call_operand.vmem [shape: f32[1,128], index: 2, kind: input, shape index: {}]
  %s3 = inlined_call_operand.vmem [shape: bf16[128,128], index: 3, kind: output, shape index: {}]
  %s4 = sld [smem:[#allocation0]]
  $region22: #{cline_fea_extract_forward.8} parent=0
    _
  %s6 = ssub.s32 1, %s4
  %s7 = scalar_select 0, %s6, %s4
  // Predicated region
  $region2: #{cline_fea_extract_forward.8} parent=0 // pred_check
    _
  $region3: #{cline_fea_extract_forward.8} parent=0 // pred_check_branch
    %9 = sbr.rel (0) target = $region5
  $region4: #{cline_fea_extract_forward.8} parent=0 // pred_region
    _
  $region5: #{cline_fea_extract_forward.8} parent=0 // pred_fallthru
    _
  // Predicated region
  $region6: #{cline_fea_extract_forward.8} parent=0 // pred_check
    _
  $region7: #{cline_fea_extract_forward.8} parent=0 // pred_check_branch
    %11 = sbr.rel (0) target = $region9
  $region8: #{cline_fea_extract_forward.8} parent=0 // pred_region
    _
  $region9: #{cline_fea_extract_forward.8} parent=0 // pred_fallthru
    _
  // Predicated region
  $region10: #{cline_fea_extract_forward.8} parent=0 // pred_check
    _
  $region11: #{cline_fea_extract_forward.8} parent=0 // pred_check_branch
    %13 = sbr.rel (0) target = $region13
  $region12: #{cline_fea_extract_forward.8} parent=0 // pred_region
    _
  $region13: #{cline_fea_extract_forward.8} parent=0 // pred_fallthru
    _
  %v15 = vld [vmem:[%s0] sm:$0xf]
  %v16 = vld [vmem:[%s0 + $0x4] sm:$0xf]
  %v17 = vld [vmem:[%s0 + $0x8] sm:$0xf]
  %v18 = vld [vmem:[%s0 + $0xc] sm:$0xf]
  %v19 = vld [vmem:[%s0 + $0x10] sm:$0xf]
  %v20 = vld [vmem:[%s0 + $0x14] sm:$0xf]
  %v21 = vld [vmem:[%s0 + $0x18] sm:$0xf]
  %v22 = vld [vmem:[%s0 + $0x1c] sm:$0xf]
  %v23 = vld [vmem:[%s0 + $0x20] sm:$0xf]
  %v24 = vld [vmem:[%s0 + $0x24] sm:$0xf]
  %v25 = vld [vmem:[%s0 + $0x28] sm:$0xf]
  %v26 = vld [vmem:[%s0 + $0x2c] sm:$0xf]
  %v27 = vld [vmem:[%s0 + $0x30] sm:$0xf]
  %v28 = vld [vmem:[%s0 + $0x34] sm:$0xf]
  %v29 = vld [vmem:[%s0 + $0x38] sm:$0xf]
  %v30 = vld [vmem:[%s0 + $0x3c] sm:$0xf]
  %v31 = vld [vmem:[%s1] sm:$0xf]
  %v32 = vld [vmem:[%s1 + $0x4] sm:$0xf]
  %v33 = vld [vmem:[%s1 + $0x8] sm:$0xf]
  %v34 = vld [vmem:[%s1 + $0xc] sm:$0xf]
  %v35 = vld [vmem:[%s1 + $0x10] sm:$0xf]
  %v36 = vld [vmem:[%s1 + $0x14] sm:$0xf]
  %v37 = vld [vmem:[%s1 + $0x18] sm:$0xf]
  %v38 = vld [vmem:[%s1 + $0x1c] sm:$0xf]
  %v39 = vld [vmem:[%s1 + $0x20] sm:$0xf]
  %v40 = vld [vmem:[%s1 + $0x24] sm:$0xf]
  %v41 = vld [vmem:[%s1 + $0x28] sm:$0xf]
  %v42 = vld [vmem:[%s1 + $0x2c] sm:$0xf]
  %v43 = vld [vmem:[%s1 + $0x30] sm:$0xf]
  %v44 = vld [vmem:[%s1 + $0x34] sm:$0xf]
  %v45 = vld [vmem:[%s1 + $0x38] sm:$0xf]
  %v46 = vld [vmem:[%s1 + $0x3c] sm:$0xf]
  %v47 = vld [vmem:[%s2] sm:$0x1]
  %v49 = vlaneseq
  %v50 = vshrl.u32 %v49, 7
  %v51 = vsub.s32 0, %v50
  %v52 = vrot.slane %v47, %v51
  %v70 = vunpack.c.l.b16 %v15
  %v71 = vunpack.c.l.b16 %v16
  %v72 = vunpack.c.l.b16 %v17
  %v73 = vunpack.c.l.b16 %v18
  %v74 = vunpack.c.l.b16 %v19
  %v75 = vunpack.c.l.b16 %v20
  %v76 = vunpack.c.l.b16 %v21
  %v77 = vunpack.c.l.b16 %v22
  %v78 = vunpack.c.l.b16 %v23
  %v79 = vunpack.c.l.b16 %v24
  %v80 = vunpack.c.l.b16 %v25
  %v81 = vunpack.c.l.b16 %v26
  %v82 = vunpack.c.l.b16 %v27
  %v83 = vunpack.c.l.b16 %v28
  %v84 = vunpack.c.l.b16 %v29
  %v85 = vunpack.c.l.b16 %v30
  %v86 = vpack.c.b16 %v71, %v70
  %v87 = vpack.c.b16 %v73, %v72
  %v88 = vpack.c.b16 %v75, %v74
  %v89 = vpack.c.b16 %v77, %v76
  %v90 = vpack.c.b16 %v79, %v78
  %v91 = vpack.c.b16 %v81, %v80
  %v92 = vpack.c.b16 %v83, %v82
  %v93 = vpack.c.b16 %v85, %v84
  %v118 = vunpack.c.l.b16 %v31
  %v119 = vunpack.c.l.b16 %v32
  %v120 = vunpack.c.l.b16 %v33
  %v121 = vunpack.c.l.b16 %v34
  %v122 = vunpack.c.l.b16 %v35
  %v123 = vunpack.c.l.b16 %v36
  %v124 = vunpack.c.l.b16 %v37
  %v125 = vunpack.c.l.b16 %v38
  %v126 = vunpack.c.l.b16 %v39
  %v127 = vunpack.c.l.b16 %v40
  %v128 = vunpack.c.l.b16 %v41
  %v129 = vunpack.c.l.b16 %v42
  %v130 = vunpack.c.l.b16 %v43
  %v131 = vunpack.c.l.b16 %v44
  %v132 = vunpack.c.l.b16 %v45
  %v133 = vunpack.c.l.b16 %v46
  %v134 = vpack.c.b16 %v119, %v118
  %v135 = vpack.c.b16 %v121, %v120
  %v136 = vpack.c.b16 %v123, %v122
  %v137 = vpack.c.b16 %v125, %v124
  %v138 = vpack.c.b16 %v127, %v126
  %v139 = vpack.c.b16 %v129, %v128
  %v140 = vpack.c.b16 %v131, %v130
  %v141 = vpack.c.b16 %v133, %v132
  %150 = vmatprep.subr.bf16.mxu0 0
  %151 = vmatpush1.bf16.msra.mxu0 %v134
  %152 = vmatprep.subr.bf16.mxu0 0
  %153 = vmatpush1.bf16.msra.mxu0 %v135
  %154 = vmatprep.subr.bf16.mxu0 0
  %155 = vmatpush1.bf16.msra.mxu0 %v136
  %156 = vmatprep.subr.bf16.mxu0 0
  %157 = vmatpush1.bf16.msra.mxu0 %v137
  %158 = vmatprep.subr.bf16.mxu0 0
  %159 = vmatpush1.bf16.msra.mxu0 %v138
  %160 = vmatprep.subr.bf16.mxu0 0
  %161 = vmatpush1.bf16.msra.mxu0 %v139
  %162 = vmatprep.subr.bf16.mxu0 0
  %163 = vmatpush1.bf16.msra.mxu0 %v140
  %164 = vmatprep.subr.bf16.mxu0 0
  %165 = vmatpush1.bf16.msra.mxu0 %v141
  %166 = vmatprep.subr.bf16.mxu0 0
  %167 = vmatpush1.bf16.msra.mxu0 0
  %168 = vmatprep.subr.bf16.mxu0 0
  %169 = vmatpush1.bf16.msra.mxu0 0
  %170 = vmatprep.subr.bf16.mxu0 0
  %171 = vmatpush1.bf16.msra.mxu0 0
  %172 = vmatprep.subr.bf16.mxu0 0
  %173 = vmatpush1.bf16.msra.mxu0 0
  %174 = vmatprep.subr.bf16.mxu0 0
  %175 = vmatpush1.bf16.msra.mxu0 0
  %176 = vmatprep.subr.bf16.mxu0 0
  %177 = vmatpush1.bf16.msra.mxu0 0
  %178 = vmatprep.subr.bf16.mxu0 0
  %179 = vmatpush1.bf16.msra.mxu0 0
  %180 = vmatprep.subr.bf16.mxu0 0
  %181 = vmatpush1.bf16.msra.mxu0 0
  %182 = vmatprep.mubr.bf16.mxu0 0
  %183 = vmatmul.mubr.bf16.gmra.mrb[0].mxu0 %v86
  %v184 = vpop.f32.mrb[0].mxu0
  %v185 = vadd.f32 %v52, %v184
  %v186 = vpop.f32.mrb[0].mxu0
  %v187 = vpop.f32.mrb[0].mxu0
  %v188 = vadd.f32 %v52, %v187
  %v189 = vpop.f32.mrb[0].mxu0
  %190 = vmatprep.mubr.bf16.mxu0 0
  %191 = vmatmul.mubr.bf16.gmra.mrb[0].mxu0 %v87
  %v192 = vpop.f32.mrb[0].mxu0
  %v193 = vadd.f32 %v52, %v192
  %v194 = vpop.f32.mrb[0].mxu0
  %v195 = vpop.f32.mrb[0].mxu0
  %v196 = vadd.f32 %v52, %v195
  %v197 = vpop.f32.mrb[0].mxu0
  %198 = vmatprep.mubr.bf16.mxu0 0
  %199 = vmatmul.mubr.bf16.gmra.mrb[0].mxu0 %v88
  %v200 = vpop.f32.mrb[0].mxu0
  %v201 = vadd.f32 %v52, %v200
  %v202 = vpop.f32.mrb[0].mxu0
  %v203 = vpop.f32.mrb[0].mxu0
  %v204 = vadd.f32 %v52, %v203
  %v205 = vpop.f32.mrb[0].mxu0
  %206 = vmatprep.mubr.bf16.mxu0 0
  %207 = vmatmul.mubr.bf16.gmra.mrb[0].mxu0 %v89
  %v208 = vpop.f32.mrb[0].mxu0
  %v209 = vadd.f32 %v52, %v208
  %v210 = vpop.f32.mrb[0].mxu0
  %v211 = vpop.f32.mrb[0].mxu0
  %v212 = vadd.f32 %v52, %v211
  %v213 = vpop.f32.mrb[0].mxu0
  %214 = vmatprep.mubr.bf16.mxu0 0
  %215 = vmatmul.mubr.bf16.gmra.mrb[0].mxu0 %v90
  %v216 = vpop.f32.mrb[0].mxu0
  %v217 = vadd.f32 %v52, %v216
  %v218 = vpop.f32.mrb[0].mxu0
  %v219 = vpop.f32.mrb[0].mxu0
  %v220 = vadd.f32 %v52, %v219
  %v221 = vpop.f32.mrb[0].mxu0
  %222 = vmatprep.mubr.bf16.mxu0 0
  %223 = vmatmul.mubr.bf16.gmra.mrb[0].mxu0 %v91
  %v224 = vpop.f32.mrb[0].mxu0
  %v225 = vadd.f32 %v52, %v224
  %v226 = vpop.f32.mrb[0].mxu0
  %v227 = vpop.f32.mrb[0].mxu0
  %v228 = vadd.f32 %v52, %v227
  %v229 = vpop.f32.mrb[0].mxu0
  %230 = vmatprep.mubr.bf16.mxu0 0
  %231 = vmatmul.mubr.bf16.gmra.mrb[0].mxu0 %v92
  %v232 = vpop.f32.mrb[0].mxu0
  %v233 = vadd.f32 %v52, %v232
  %v234 = vpop.f32.mrb[0].mxu0
  %v235 = vpop.f32.mrb[0].mxu0
  %v236 = vadd.f32 %v52, %v235
  %v237 = vpop.f32.mrb[0].mxu0
  %238 = vmatprep.mubr.bf16.mxu0 0
  %239 = vmatmul.mubr.bf16.gmra.mrb[0].mxu0 %v93
  %v240 = vpop.f32.mrb[0].mxu0
  %v241 = vadd.f32 %v52, %v240
  %v242 = vpop.f32.mrb[0].mxu0
  %v243 = vpop.f32.mrb[0].mxu0
  %v244 = vadd.f32 %v52, %v243
  %v245 = vpop.f32.mrb[0].mxu0
  %246 = vdwg.mxu0
  %v247 = vpack.c.bf16 %v188, %v185
  %v248 = vpack.c.bf16 %v196, %v193
  %v249 = vpack.c.bf16 %v204, %v201
  %v250 = vpack.c.bf16 %v212, %v209
  %v251 = vpack.c.bf16 %v220, %v217
  %v252 = vpack.c.bf16 %v228, %v225
  %v253 = vpack.c.bf16 %v236, %v233
  %v254 = vpack.c.bf16 %v244, %v241
  %v263 = vunpack.c.l.b16 %v247
  %v264 = vunpack.c.h.b16 %v247
  %v265 = vunpack.c.l.b16 %v248
  %v266 = vunpack.c.h.b16 %v248
  %v267 = vunpack.c.l.b16 %v249
  %v268 = vunpack.c.h.b16 %v249
  %v269 = vunpack.c.l.b16 %v250
  %v270 = vunpack.c.h.b16 %v250
  %v271 = vunpack.c.l.b16 %v251
  %v272 = vunpack.c.h.b16 %v251
  %v273 = vunpack.c.l.b16 %v252
  %v274 = vunpack.c.h.b16 %v252
  %v275 = vunpack.c.l.b16 %v253
  %v276 = vunpack.c.h.b16 %v253
  %v277 = vunpack.c.l.b16 %v254
  %v278 = vunpack.c.h.b16 %v254
  %v279 = vpack.c.b16 %v263, %v263
  %v280 = vpack.c.b16 %v264, %v264
  %v281 = vpack.c.b16 %v265, %v265
  %v282 = vpack.c.b16 %v266, %v266
  %v283 = vpack.c.b16 %v267, %v267
  %v284 = vpack.c.b16 %v268, %v268
  %v285 = vpack.c.b16 %v269, %v269
  %v286 = vpack.c.b16 %v270, %v270
  %v287 = vpack.c.b16 %v271, %v271
  %v288 = vpack.c.b16 %v272, %v272
  %v289 = vpack.c.b16 %v273, %v273
  %v290 = vpack.c.b16 %v274, %v274
  %v291 = vpack.c.b16 %v275, %v275
  %v292 = vpack.c.b16 %v276, %v276
  %v293 = vpack.c.b16 %v277, %v277
  %v294 = vpack.c.b16 %v278, %v278
  %311 = vst [vmem:[%s3] sm:$0xf] %v279
  %312 = vst [vmem:[%s3 + $0x4] sm:$0xf] %v280
  %313 = vst [vmem:[%s3 + $0x8] sm:$0xf] %v281
  %314 = vst [vmem:[%s3 + $0xc] sm:$0xf] %v282
  %315 = vst [vmem:[%s3 + $0x10] sm:$0xf] %v283
  %316 = vst [vmem:[%s3 + $0x14] sm:$0xf] %v284
  %317 = vst [vmem:[%s3 + $0x18] sm:$0xf] %v285
  %318 = vst [vmem:[%s3 + $0x1c] sm:$0xf] %v286
  %319 = vst [vmem:[%s3 + $0x20] sm:$0xf] %v287
  %320 = vst [vmem:[%s3 + $0x24] sm:$0xf] %v288
  %321 = vst [vmem:[%s3 + $0x28] sm:$0xf] %v289
  %322 = vst [vmem:[%s3 + $0x2c] sm:$0xf] %v290
  %323 = vst [vmem:[%s3 + $0x30] sm:$0xf] %v291
  %324 = vst [vmem:[%s3 + $0x34] sm:$0xf] %v292
  %325 = vst [vmem:[%s3 + $0x38] sm:$0xf] %v293
  %326 = vst [vmem:[%s3 + $0x3c] sm:$0xf] %v294
  // Predicated region
  $region14: #{cline_fea_extract_forward.8} parent=0 // pred_check
    _
  $region15: #{cline_fea_extract_forward.8} parent=0 // pred_check_branch
    %328 = sbr.rel (0) target = $region17
  $region16: #{cline_fea_extract_forward.8} parent=0 // pred_region
    _
  $region17: #{cline_fea_extract_forward.8} parent=0 // pred_fallthru
    _
  // Predicated region
  $region18: #{cline_fea_extract_forward.8} parent=0 // pred_check
    _
  $region19: #{cline_fea_extract_forward.8} parent=0 // pred_check_branch
    %330 = sbr.rel (0) target = $region21
  $region20: #{cline_fea_extract_forward.8} parent=0 // pred_region
    _
  $region21: #{cline_fea_extract_forward.8} parent=0 // pred_fallthru
    _

// kernel: cline_fea_extract_forward.9
$region0: #{cline_fea_extract_forward.9}
  #allocation0 [shape = 'u32[]', space=smem, size = 0x4, offset = 0x4, fixed_abs, tag = 'smem constant byte address 0x4 - core index']
  #allocation1 [shape = 'u32[144,128]{1,0:T(1,128)}', space=vmem, size = 0x12000, scoped, tag = 'internal scratch']
  %s0 = inlined_call_operand.vmem [shape: bf16[128,128], index: 0, kind: input, shape index: {}]
  %s1 = inlined_call_operand.vmem [shape: bf16[128,128], index: 1, kind: input, shape index: {}]
  %s2 = inlined_call_operand.vmem [shape: f32[1,128], index: 2, kind: input, shape index: {}]
  %s3 = inlined_call_operand.vmem [shape: f32[128,128], index: 3, kind: output, shape index: {0}]
  %s4 = inlined_call_operand.vmem [shape: f32[1,1,128], index: 4, kind: output, shape index: {1}]
  %s5 = inlined_call_operand.vmem [shape: f32[1,1,128], index: 5, kind: output, shape index: {2}]
  %6 = xla_tuple %s3, %s4, %s5
  %s7 = sld [smem:[#allocation0]]
  $region46: #{cline_fea_extract_forward.9} parent=0
    _
  %s9 = ssub.s32 1, %s7
  %s10 = scalar_select 0, %s9, %s7
  // Predicated region
  $region2: #{cline_fea_extract_forward.9} parent=0 // pred_check
    _
  $region3: #{cline_fea_extract_forward.9} parent=0 // pred_check_branch
    %12 = sbr.rel (0) target = $region5
  $region4: #{cline_fea_extract_forward.9} parent=0 // pred_region
    _
  $region5: #{cline_fea_extract_forward.9} parent=0 // pred_fallthru
    _
  // Predicated region
  $region6: #{cline_fea_extract_forward.9} parent=0 // pred_check
    _
  $region7: #{cline_fea_extract_forward.9} parent=0 // pred_check_branch
    %14 = sbr.rel (0) target = $region9
  $region8: #{cline_fea_extract_forward.9} parent=0 // pred_region
    _
  $region9: #{cline_fea_extract_forward.9} parent=0 // pred_fallthru
    _
  // Predicated region
  $region10: #{cline_fea_extract_forward.9} parent=0 // pred_check
    _
  $region11: #{cline_fea_extract_forward.9} parent=0 // pred_check_branch
    %16 = sbr.rel (0) target = $region13
  $region12: #{cline_fea_extract_forward.9} parent=0 // pred_region
    _
  $region13: #{cline_fea_extract_forward.9} parent=0 // pred_fallthru
    _
  %s18 = smul.u32 0, 128
  %p19 = scmp.eq.s32.totalorder 0, 0
  // Predicated region
  $region14: #{cline_fea_extract_forward.9} parent=0 // pred_check
    %p20 = pneg %p19
  $region15: #{cline_fea_extract_forward.9} parent=0 // pred_check_branch
    %22 = sbr.rel (%p20) target = $region17
  $region16: #{cline_fea_extract_forward.9} parent=0 // pred_region
    %23 = vst [vmem:[%s3] sm:$0xff] 0.0
    %24 = vst [vmem:[%s3 + $0x8] sm:$0xff] 0.0
    %25 = vst [vmem:[%s3 + $0x10] sm:$0xff] 0.0
    %26 = vst [vmem:[%s3 + $0x18] sm:$0xff] 0.0
    %27 = vst [vmem:[%s3 + $0x20] sm:$0xff] 0.0
    %28 = vst [vmem:[%s3 + $0x28] sm:$0xff] 0.0
    %29 = vst [vmem:[%s3 + $0x30] sm:$0xff] 0.0
    %30 = vst [vmem:[%s3 + $0x38] sm:$0xff] 0.0
    %31 = vst [vmem:[%s3 + $0x40] sm:$0xff] 0.0
    %32 = vst [vmem:[%s3 + $0x48] sm:$0xff] 0.0
    %33 = vst [vmem:[%s3 + $0x50] sm:$0xff] 0.0
    %34 = vst [vmem:[%s3 + $0x58] sm:$0xff] 0.0
    %35 = vst [vmem:[%s3 + $0x60] sm:$0xff] 0.0
    %36 = vst [vmem:[%s3 + $0x68] sm:$0xff] 0.0
    %37 = vst [vmem:[%s3 + $0x70] sm:$0xff] 0.0
    %38 = vst [vmem:[%s3 + $0x78] sm:$0xff] 0.0
  $region17: #{cline_fea_extract_forward.9} parent=0 // pred_fallthru
    _
  %v39 = vld [vmem:[%s3] sm:$0xff]
  %v40 = vld [vmem:[%s3 + $0x8] sm:$0xff]
  %v41 = vld [vmem:[%s3 + $0x10] sm:$0xff]
  %v42 = vld [vmem:[%s3 + $0x18] sm:$0xff]
  %v43 = vld [vmem:[%s3 + $0x20] sm:$0xff]
  %v44 = vld [vmem:[%s3 + $0x28] sm:$0xff]
  %v45 = vld [vmem:[%s3 + $0x30] sm:$0xff]
  %v46 = vld [vmem:[%s3 + $0x38] sm:$0xff]
  %v47 = vld [vmem:[%s3 + $0x40] sm:$0xff]
  %v48 = vld [vmem:[%s3 + $0x48] sm:$0xff]
  %v49 = vld [vmem:[%s3 + $0x50] sm:$0xff]
  %v50 = vld [vmem:[%s3 + $0x58] sm:$0xff]
  %v51 = vld [vmem:[%s3 + $0x60] sm:$0xff]
  %v52 = vld [vmem:[%s3 + $0x68] sm:$0xff]
  %v53 = vld [vmem:[%s3 + $0x70] sm:$0xff]
  %v54 = vld [vmem:[%s3 + $0x78] sm:$0xff]
  %v55 = vld [vmem:[%s0] sm:$0xf]
  %v56 = vld [vmem:[%s0 + $0x4] sm:$0xf]
  %v57 = vld [vmem:[%s0 + $0x8] sm:$0xf]
  %v58 = vld [vmem:[%s0 + $0xc] sm:$0xf]
  %v59 = vld [vmem:[%s0 + $0x10] sm:$0xf]
  %v60 = vld [vmem:[%s0 + $0x14] sm:$0xf]
  %v61 = vld [vmem:[%s0 + $0x18] sm:$0xf]
  %v62 = vld [vmem:[%s0 + $0x1c] sm:$0xf]
  %v63 = vld [vmem:[%s0 + $0x20] sm:$0xf]
  %v64 = vld [vmem:[%s0 + $0x24] sm:$0xf]
  %v65 = vld [vmem:[%s0 + $0x28] sm:$0xf]
  %v66 = vld [vmem:[%s0 + $0x2c] sm:$0xf]
  %v67 = vld [vmem:[%s0 + $0x30] sm:$0xf]
  %v68 = vld [vmem:[%s0 + $0x34] sm:$0xf]
  %v69 = vld [vmem:[%s0 + $0x38] sm:$0xf]
  %v70 = vld [vmem:[%s0 + $0x3c] sm:$0xf]
  %v71 = vld [vmem:[%s1] sm:$0xf]
  %v72 = vld [vmem:[%s1 + $0x4] sm:$0xf]
  %v73 = vld [vmem:[%s1 + $0x8] sm:$0xf]
  %v74 = vld [vmem:[%s1 + $0xc] sm:$0xf]
  %v75 = vld [vmem:[%s1 + $0x10] sm:$0xf]
  %v76 = vld [vmem:[%s1 + $0x14] sm:$0xf]
  %v77 = vld [vmem:[%s1 + $0x18] sm:$0xf]
  %v78 = vld [vmem:[%s1 + $0x1c] sm:$0xf]
  %v79 = vld [vmem:[%s1 + $0x20] sm:$0xf]
  %v80 = vld [vmem:[%s1 + $0x24] sm:$0xf]
  %v81 = vld [vmem:[%s1 + $0x28] sm:$0xf]
  %v82 = vld [vmem:[%s1 + $0x2c] sm:$0xf]
  %v83 = vld [vmem:[%s1 + $0x30] sm:$0xf]
  %v84 = vld [vmem:[%s1 + $0x34] sm:$0xf]
  %v85 = vld [vmem:[%s1 + $0x38] sm:$0xf]
  %v86 = vld [vmem:[%s1 + $0x3c] sm:$0xf]
  %v103 = vunpack.c.l.b16 %v55
  %v104 = vunpack.c.l.b16 %v56
  %v105 = vunpack.c.l.b16 %v57
  %v106 = vunpack.c.l.b16 %v58
  %v107 = vunpack.c.l.b16 %v59
  %v108 = vunpack.c.l.b16 %v60
  %v109 = vunpack.c.l.b16 %v61
  %v110 = vunpack.c.l.b16 %v62
  %v111 = vunpack.c.l.b16 %v63
  %v112 = vunpack.c.l.b16 %v64
  %v113 = vunpack.c.l.b16 %v65
  %v114 = vunpack.c.l.b16 %v66
  %v115 = vunpack.c.l.b16 %v67
  %v116 = vunpack.c.l.b16 %v68
  %v117 = vunpack.c.l.b16 %v69
  %v118 = vunpack.c.l.b16 %v70
  %v119 = vpack.c.b16 %v104, %v103
  %v120 = vpack.c.b16 %v106, %v105
  %v121 = vpack.c.b16 %v108, %v107
  %v122 = vpack.c.b16 %v110, %v109
  %v123 = vpack.c.b16 %v112, %v111
  %v124 = vpack.c.b16 %v114, %v113
  %v125 = vpack.c.b16 %v116, %v115
  %v126 = vpack.c.b16 %v118, %v117
  %v151 = vunpack.c.l.b16 %v71
  %v152 = vunpack.c.l.b16 %v72
  %v153 = vunpack.c.l.b16 %v73
  %v154 = vunpack.c.l.b16 %v74
  %v155 = vunpack.c.l.b16 %v75
  %v156 = vunpack.c.l.b16 %v76
  %v157 = vunpack.c.l.b16 %v77
  %v158 = vunpack.c.l.b16 %v78
  %v159 = vunpack.c.l.b16 %v79
  %v160 = vunpack.c.l.b16 %v80
  %v161 = vunpack.c.l.b16 %v81
  %v162 = vunpack.c.l.b16 %v82
  %v163 = vunpack.c.l.b16 %v83
  %v164 = vunpack.c.l.b16 %v84
  %v165 = vunpack.c.l.b16 %v85
  %v166 = vunpack.c.l.b16 %v86
  %v167 = vpack.c.b16 %v152, %v151
  %v168 = vpack.c.b16 %v154, %v153
  %v169 = vpack.c.b16 %v156, %v155
  %v170 = vpack.c.b16 %v158, %v157
  %v171 = vpack.c.b16 %v160, %v159
  %v172 = vpack.c.b16 %v162, %v161
  %v173 = vpack.c.b16 %v164, %v163
  %v174 = vpack.c.b16 %v166, %v165
  %183 = vmatprep.subr.bf16.mxu0 0
  %184 = vmatpush1.bf16.msra.mxu0 %v167
  %185 = vmatprep.subr.bf16.mxu0 0
  %186 = vmatpush1.bf16.msra.mxu0 %v168
  %187 = vmatprep.subr.bf16.mxu0 0
  %188 = vmatpush1.bf16.msra.mxu0 %v169
  %189 = vmatprep.subr.bf16.mxu0 0
  %190 = vmatpush1.bf16.msra.mxu0 %v170
  %191 = vmatprep.subr.bf16.mxu0 0
  %192 = vmatpush1.bf16.msra.mxu0 %v171
  %193 = vmatprep.subr.bf16.mxu0 0
  %194 = vmatpush1.bf16.msra.mxu0 %v172
  %195 = vmatprep.subr.bf16.mxu0 0
  %196 = vmatpush1.bf16.msra.mxu0 %v173
  %197 = vmatprep.subr.bf16.mxu0 0
  %198 = vmatpush1.bf16.msra.mxu0 %v174
  %199 = vmatprep.subr.bf16.mxu0 0
  %200 = vmatpush1.bf16.msra.mxu0 0
  %201 = vmatprep.subr.bf16.mxu0 0
  %202 = vmatpush1.bf16.msra.mxu0 0
  %203 = vmatprep.subr.bf16.mxu0 0
  %204 = vmatpush1.bf16.msra.mxu0 0
  %205 = vmatprep.subr.bf16.mxu0 0
  %206 = vmatpush1.bf16.msra.mxu0 0
  %207 = vmatprep.subr.bf16.mxu0 0
  %208 = vmatpush1.bf16.msra.mxu0 0
  %209 = vmatprep.subr.bf16.mxu0 0
  %210 = vmatpush1.bf16.msra.mxu0 0
  %211 = vmatprep.subr.bf16.mxu0 0
  %212 = vmatpush1.bf16.msra.mxu0 0
  %213 = vmatprep.subr.bf16.mxu0 0
  %214 = vmatpush1.bf16.msra.mxu0 0
  %215 = vmatprep.mubr.bf16.mxu0 0
  %216 = vmatmul.mubr.bf16.gmra.mrb[0].mxu0 %v119
  %v217 = vpop.f32.mrb[0].mxu0
  %v218 = vadd.f32 0.0, %v217
  %v219 = vpop.f32.mrb[0].mxu0
  %v220 = vpop.f32.mrb[0].mxu0
  %v221 = vadd.f32 0.0, %v220
  %v222 = vpop.f32.mrb[0].mxu0
  %223 = vmatprep.mubr.bf16.mxu0 0
  %224 = vmatmul.mubr.bf16.gmra.mrb[0].mxu0 %v120
  %v225 = vpop.f32.mrb[0].mxu0
  %v226 = vadd.f32 0.0, %v225
  %v227 = vpop.f32.mrb[0].mxu0
  %v228 = vpop.f32.mrb[0].mxu0
  %v229 = vadd.f32 0.0, %v228
  %v230 = vpop.f32.mrb[0].mxu0
  %231 = vmatprep.mubr.bf16.mxu0 0
  %232 = vmatmul.mubr.bf16.gmra.mrb[0].mxu0 %v121
  %v233 = vpop.f32.mrb[0].mxu0
  %v234 = vadd.f32 0.0, %v233
  %v235 = vpop.f32.mrb[0].mxu0
  %v236 = vpop.f32.mrb[0].mxu0
  %v237 = vadd.f32 0.0, %v236
  %v238 = vpop.f32.mrb[0].mxu0
  %239 = vmatprep.mubr.bf16.mxu0 0
  %240 = vmatmul.mubr.bf16.gmra.mrb[0].mxu0 %v122
  %v241 = vpop.f32.mrb[0].mxu0
  %v242 = vadd.f32 0.0, %v241
  %v243 = vpop.f32.mrb[0].mxu0
  %v244 = vpop.f32.mrb[0].mxu0
  %v245 = vadd.f32 0.0, %v244
  %v246 = vpop.f32.mrb[0].mxu0
  %247 = vmatprep.mubr.bf16.mxu0 0
  %248 = vmatmul.mubr.bf16.gmra.mrb[0].mxu0 %v123
  %v249 = vpop.f32.mrb[0].mxu0
  %v250 = vadd.f32 0.0, %v249
  %v251 = vpop.f32.mrb[0].mxu0
  %v252 = vpop.f32.mrb[0].mxu0
  %v253 = vadd.f32 0.0, %v252
  %v254 = vpop.f32.mrb[0].mxu0
  %255 = vmatprep.mubr.bf16.mxu0 0
  %256 = vmatmul.mubr.bf16.gmra.mrb[0].mxu0 %v124
  %v257 = vpop.f32.mrb[0].mxu0
  %v258 = vadd.f32 0.0, %v257
  %v259 = vpop.f32.mrb[0].mxu0
  %v260 = vpop.f32.mrb[0].mxu0
  %v261 = vadd.f32 0.0, %v260
  %v262 = vpop.f32.mrb[0].mxu0
  %263 = vmatprep.mubr.bf16.mxu0 0
  %264 = vmatmul.mubr.bf16.gmra.mrb[0].mxu0 %v125
  %v265 = vpop.f32.mrb[0].mxu0
  %v266 = vadd.f32 0.0, %v265
  %v267 = vpop.f32.mrb[0].mxu0
  %v268 = vpop.f32.mrb[0].mxu0
  %v269 = vadd.f32 0.0, %v268
  %v270 = vpop.f32.mrb[0].mxu0
  %271 = vmatprep.mubr.bf16.mxu0 0
  %272 = vmatmul.mubr.bf16.gmra.mrb[0].mxu0 %v126
  %v273 = vpop.f32.mrb[0].mxu0
  %v274 = vadd.f32 0.0, %v273
  %v275 = vpop.f32.mrb[0].mxu0
  %v276 = vpop.f32.mrb[0].mxu0
  %v277 = vadd.f32 0.0, %v276
  %v278 = vpop.f32.mrb[0].mxu0
  %279 = vdwg.mxu0
  %v280 = vadd.f32 %v39, %v218
  %v281 = vadd.f32 %v40, %v221
  %v282 = vadd.f32 %v41, %v226
  %v283 = vadd.f32 %v42, %v229
  %v284 = vadd.f32 %v43, %v234
  %v285 = vadd.f32 %v44, %v237
  %v286 = vadd.f32 %v45, %v242
  %v287 = vadd.f32 %v46, %v245
  %v288 = vadd.f32 %v47, %v250
  %v289 = vadd.f32 %v48, %v253
  %v290 = vadd.f32 %v49, %v258
  %v291 = vadd.f32 %v50, %v261
  %v292 = vadd.f32 %v51, %v266
  %v293 = vadd.f32 %v52, %v269
  %v294 = vadd.f32 %v53, %v274
  %v295 = vadd.f32 %v54, %v277
  %296 = vst [vmem:[%s3] sm:$0xff] %v280
  %297 = vst [vmem:[%s3 + $0x8] sm:$0xff] %v281
  %298 = vst [vmem:[%s3 + $0x10] sm:$0xff] %v282
  %299 = vst [vmem:[%s3 + $0x18] sm:$0xff] %v283
  %300 = vst [vmem:[%s3 + $0x20] sm:$0xff] %v284
  %301 = vst [vmem:[%s3 + $0x28] sm:$0xff] %v285
  %302 = vst [vmem:[%s3 + $0x30] sm:$0xff] %v286
  %303 = vst [vmem:[%s3 + $0x38] sm:$0xff] %v287
  %304 = vst [vmem:[%s3 + $0x40] sm:$0xff] %v288
  %305 = vst [vmem:[%s3 + $0x48] sm:$0xff] %v289
  %306 = vst [vmem:[%s3 + $0x50] sm:$0xff] %v290
  %307 = vst [vmem:[%s3 + $0x58] sm:$0xff] %v291
  %308 = vst [vmem:[%s3 + $0x60] sm:$0xff] %v292
  %309 = vst [vmem:[%s3 + $0x68] sm:$0xff] %v293
  %310 = vst [vmem:[%s3 + $0x70] sm:$0xff] %v294
  %311 = vst [vmem:[%s3 + $0x78] sm:$0xff] %v295
  // Predicated region
  $region18: #{cline_fea_extract_forward.9} parent=0 // pred_check
    %p312 = pneg %p19
  $region19: #{cline_fea_extract_forward.9} parent=0 // pred_check_branch
    %314 = sbr.rel (%p312) target = $region21
  $region20: #{cline_fea_extract_forward.9} parent=0 // pred_region
    %v315 = vlaneseq
    %v316 = vshrl.u32 %v315, 7
    %v317 = vadd.s32 %v316, 8
    %v318 = vadd.s32 %v316, 16
    %v319 = vadd.s32 %v316, 24
    %v320 = vadd.s32 %v316, 32
    %v321 = vadd.s32 %v316, 40
    %v322 = vadd.s32 %v316, 48
    %v323 = vadd.s32 %v316, 56
    %v324 = vadd.s32 %v316, 64
    %v325 = vadd.s32 %v316, 72
    %v326 = vadd.s32 %v316, 80
    %v327 = vadd.s32 %v316, 88
    %v328 = vadd.s32 %v316, 96
    %v329 = vadd.s32 %v316, 104
    %v330 = vadd.s32 %v316, 112
    %v331 = vadd.s32 %v316, 120
    %v332 = vstv %s18
    %v333 = vadd.s32 %v332, %v316
    %v334 = vadd.s32 %v332, %v317
    %v335 = vadd.s32 %v332, %v318
    %v336 = vadd.s32 %v332, %v319
    %v337 = vadd.s32 %v332, %v320
    %v338 = vadd.s32 %v332, %v321
    %v339 = vadd.s32 %v332, %v322
    %v340 = vadd.s32 %v332, %v323
    %v341 = vadd.s32 %v332, %v324
    %v342 = vadd.s32 %v332, %v325
    %v343 = vadd.s32 %v332, %v326
    %v344 = vadd.s32 %v332, %v327
    %v345 = vadd.s32 %v332, %v328
    %v346 = vadd.s32 %v332, %v329
    %v347 = vadd.s32 %v332, %v330
    %v348 = vadd.s32 %v332, %v331
    %vm349 = vcmp.lt.s32.totalorder %v333, 16
    %vm350 = vcmp.lt.s32.totalorder %v334, 16
    %vm351 = vcmp.lt.s32.totalorder %v335, 16
    %vm352 = vcmp.lt.s32.totalorder %v336, 16
    %vm353 = vcmp.lt.s32.totalorder %v337, 16
    %vm354 = vcmp.lt.s32.totalorder %v338, 16
    %vm355 = vcmp.lt.s32.totalorder %v339, 16
    %vm356 = vcmp.lt.s32.totalorder %v340, 16
    %vm357 = vcmp.lt.s32.totalorder %v341, 16
    %vm358 = vcmp.lt.s32.totalorder %v342, 16
    %vm359 = vcmp.lt.s32.totalorder %v343, 16
    %vm360 = vcmp.lt.s32.totalorder %v344, 16
    %vm361 = vcmp.lt.s32.totalorder %v345, 16
    %vm362 = vcmp.lt.s32.totalorder %v346, 16
    %vm363 = vcmp.lt.s32.totalorder %v347, 16
    %vm364 = vcmp.lt.s32.totalorder %v348, 16
    %v365 = vld [vmem:[%s3] sm:$0xff]
    %v366 = vld [vmem:[%s3 + $0x8] sm:$0xff]
    %v367 = vld [vmem:[%s3 + $0x10] sm:$0xff]
    %v368 = vld [vmem:[%s3 + $0x18] sm:$0xff]
    %v369 = vld [vmem:[%s3 + $0x20] sm:$0xff]
    %v370 = vld [vmem:[%s3 + $0x28] sm:$0xff]
    %v371 = vld [vmem:[%s3 + $0x30] sm:$0xff]
    %v372 = vld [vmem:[%s3 + $0x38] sm:$0xff]
    %v373 = vld [vmem:[%s3 + $0x40] sm:$0xff]
    %v374 = vld [vmem:[%s3 + $0x48] sm:$0xff]
    %v375 = vld [vmem:[%s3 + $0x50] sm:$0xff]
    %v376 = vld [vmem:[%s3 + $0x58] sm:$0xff]
    %v377 = vld [vmem:[%s3 + $0x60] sm:$0xff]
    %v378 = vld [vmem:[%s3 + $0x68] sm:$0xff]
    %v379 = vld [vmem:[%s3 + $0x70] sm:$0xff]
    %v380 = vld [vmem:[%s3 + $0x78] sm:$0xff]
    %v381 = vld [vmem:[%s2] sm:$0x1]
    %v383 = vlaneseq
    %v384 = vshrl.u32 %v383, 7
    %v385 = vsub.s32 0, %v384
    %v386 = vrot.slane %v381, %v385
    %v388 = vadd.f32 %v365, %v386
    %v389 = vadd.f32 %v366, %v386
    %v390 = vadd.f32 %v367, %v386
    %v391 = vadd.f32 %v368, %v386
    %v392 = vadd.f32 %v369, %v386
    %v393 = vadd.f32 %v370, %v386
    %v394 = vadd.f32 %v371, %v386
    %v395 = vadd.f32 %v372, %v386
    %v396 = vadd.f32 %v373, %v386
    %v397 = vadd.f32 %v374, %v386
    %v398 = vadd.f32 %v375, %v386
    %v399 = vadd.f32 %v376, %v386
    %v400 = vadd.f32 %v377, %v386
    %v401 = vadd.f32 %v378, %v386
    %v402 = vadd.f32 %v379, %v386
    %v403 = vadd.f32 %v380, %v386
    %v404 = vsel %vm349, 1, 0
    %v405 = vsel %vm350, 1, 0
    %v406 = vsel %vm351, 1, 0
    %v407 = vsel %vm352, 1, 0
    %v408 = vsel %vm353, 1, 0
    %v409 = vsel %vm354, 1, 0
    %v410 = vsel %vm355, 1, 0
    %v411 = vsel %vm356, 1, 0
    %v412 = vsel %vm357, 1, 0
    %v413 = vsel %vm358, 1, 0
    %v414 = vsel %vm359, 1, 0
    %v415 = vsel %vm360, 1, 0
    %v416 = vsel %vm361, 1, 0
    %v417 = vsel %vm362, 1, 0
    %v418 = vsel %vm363, 1, 0
    %v419 = vsel %vm364, 1, 0
    %vm420 = vcmp.eq.s32.totalorder %v404, 1
    %vm421 = vcmp.eq.s32.totalorder %v405, 1
    %vm422 = vcmp.eq.s32.totalorder %v406, 1
    %vm423 = vcmp.eq.s32.totalorder %v407, 1
    %vm424 = vcmp.eq.s32.totalorder %v408, 1
    %vm425 = vcmp.eq.s32.totalorder %v409, 1
    %vm426 = vcmp.eq.s32.totalorder %v410, 1
    %vm427 = vcmp.eq.s32.totalorder %v411, 1
    %vm428 = vcmp.eq.s32.totalorder %v412, 1
    %vm429 = vcmp.eq.s32.totalorder %v413, 1
    %vm430 = vcmp.eq.s32.totalorder %v414, 1
    %vm431 = vcmp.eq.s32.totalorder %v415, 1
    %vm432 = vcmp.eq.s32.totalorder %v416, 1
    %vm433 = vcmp.eq.s32.totalorder %v417, 1
    %vm434 = vcmp.eq.s32.totalorder %v418, 1
    %vm435 = vcmp.eq.s32.totalorder %v419, 1
    %v436 = vsel %vm420, %v388, 0.0
    %v437 = vsel %vm421, %v389, 0.0
    %v438 = vsel %vm422, %v390, 0.0
    %v439 = vsel %vm423, %v391, 0.0
    %v440 = vsel %vm424, %v392, 0.0
    %v441 = vsel %vm425, %v393, 0.0
    %v442 = vsel %vm426, %v394, 0.0
    %v443 = vsel %vm427, %v395, 0.0
    %v444 = vsel %vm428, %v396, 0.0
    %v445 = vsel %vm429, %v397, 0.0
    %v446 = vsel %vm430, %v398, 0.0
    %v447 = vsel %vm431, %v399, 0.0
    %v448 = vsel %vm432, %v400, 0.0
    %v449 = vsel %vm433, %v401, 0.0
    %v450 = vsel %vm434, %v402, 0.0
    %v451 = vsel %vm435, %v403, 0.0
    %452 = vst [vmem:[%s3] sm:$0xff] %v436
    %453 = vst [vmem:[%s3 + $0x8] sm:$0xff] %v437
    %454 = vst [vmem:[%s3 + $0x10] sm:$0xff] %v438
    %455 = vst [vmem:[%s3 + $0x18] sm:$0xff] %v439
    %456 = vst [vmem:[%s3 + $0x20] sm:$0xff] %v440
    %457 = vst [vmem:[%s3 + $0x28] sm:$0xff] %v441
    %458 = vst [vmem:[%s3 + $0x30] sm:$0xff] %v442
    %459 = vst [vmem:[%s3 + $0x38] sm:$0xff] %v443
    %460 = vst [vmem:[%s3 + $0x40] sm:$0xff] %v444
    %461 = vst [vmem:[%s3 + $0x48] sm:$0xff] %v445
    %462 = vst [vmem:[%s3 + $0x50] sm:$0xff] %v446
    %463 = vst [vmem:[%s3 + $0x58] sm:$0xff] %v447
    %464 = vst [vmem:[%s3 + $0x60] sm:$0xff] %v448
    %465 = vst [vmem:[%s3 + $0x68] sm:$0xff] %v449
    %466 = vst [vmem:[%s3 + $0x70] sm:$0xff] %v450
    %467 = vst [vmem:[%s3 + $0x78] sm:$0xff] %v451
    %v468 = vadd.f32 %v436, %v437
    %v469 = vadd.f32 %v468, %v438
    %v470 = vadd.f32 %v469, %v439
    %v471 = vadd.f32 %v470, %v440
    %v472 = vadd.f32 %v471, %v441
    %v473 = vadd.f32 %v472, %v442
    %v474 = vadd.f32 %v473, %v443
    %v475 = vadd.f32 %v474, %v444
    %v476 = vadd.f32 %v475, %v445
    %v477 = vadd.f32 %v476, %v446
    %v478 = vadd.f32 %v477, %v447
    %v479 = vadd.f32 %v478, %v448
    %v480 = vadd.f32 %v479, %v449
    %v481 = vadd.f32 %v480, %v450
    %v482 = vadd.f32 %v481, %v451
    %v483 = vrot.slane %v482, 4
    %v484 = vadd.f32 %v482, %v483
    %v485 = vrot.slane %v484, 2
    %v486 = vadd.f32 %v484, %v485
    %v487 = vrot.slane %v486, 1
    %v488 = vadd.f32 %v486, %v487
    %489 = vst [vmem:[%s4] sm:$0x1] %v488
    %v490 = vmul.f32 %v436, %v436
    %v491 = vmul.f32 %v437, %v437
    %v492 = vmul.f32 %v438, %v438
    %v493 = vmul.f32 %v439, %v439
    %v494 = vmul.f32 %v440, %v440
    %v495 = vmul.f32 %v441, %v441
    %v496 = vmul.f32 %v442, %v442
    %v497 = vmul.f32 %v443, %v443
    %v498 = vmul.f32 %v444, %v444
    %v499 = vmul.f32 %v445, %v445
    %v500 = vmul.f32 %v446, %v446
    %v501 = vmul.f32 %v447, %v447
    %v502 = vmul.f32 %v448, %v448
    %v503 = vmul.f32 %v449, %v449
    %v504 = vmul.f32 %v450, %v450
    %v505 = vmul.f32 %v451, %v451
    %v506 = vadd.f32 %v490, %v491
    %v507 = vadd.f32 %v506, %v492
    %v508 = vadd.f32 %v507, %v493
    %v509 = vadd.f32 %v508, %v494
    %v510 = vadd.f32 %v509, %v495
    %v511 = vadd.f32 %v510, %v496
    %v512 = vadd.f32 %v511, %v497
    %v513 = vadd.f32 %v512, %v498
    %v514 = vadd.f32 %v513, %v499
    %v515 = vadd.f32 %v514, %v500
    %v516 = vadd.f32 %v515, %v501
    %v517 = vadd.f32 %v516, %v502
    %v518 = vadd.f32 %v517, %v503
    %v519 = vadd.f32 %v518, %v504
    %v520 = vadd.f32 %v519, %v505
    %v521 = vrot.slane %v520, 4
    %v522 = vadd.f32 %v520, %v521
    %v523 = vrot.slane %v522, 2
    %v524 = vadd.f32 %v522, %v523
    %v525 = vrot.slane %v524, 1
    %v526 = vadd.f32 %v524, %v525
    %527 = vst [vmem:[%s5] sm:$0x1] %v526
  $region21: #{cline_fea_extract_forward.9} parent=0 // pred_fallthru
    _
  // Predicated region
  $region22: #{cline_fea_extract_forward.9} parent=0 // pred_check
    _
  $region23: #{cline_fea_extract_forward.9} parent=0 // pred_check_branch
    %529 = sbr.rel (0) target = $region25
  $region24: #{cline_fea_extract_forward.9} parent=0 // pred_region
    _
  $region25: #{cline_fea_extract_forward.9} parent=0 // pred_fallthru
    _
  // Predicated region
  $region26: #{cline_fea_extract_forward.9} parent=0 // pred_check
    _
  $region27: #{cline_fea_extract_forward.9} parent=0 // pred_check_branch
    %531 = sbr.rel (0) target = $region29
  $region28: #{cline_fea_extract_forward.9} parent=0 // pred_region
    _
  $region29: #{cline_fea_extract_forward.9} parent=0 // pred_fallthru
    _
  // Predicated region
  $region30: #{cline_fea_extract_forward.9} parent=0 // pred_check
    _
  $region31: #{cline_fea_extract_forward.9} parent=0 // pred_check_branch
    %533 = sbr.rel (0) target = $region33
  $region32: #{cline_fea_extract_forward.9} parent=0 // pred_region
    _
  $region33: #{cline_fea_extract_forward.9} parent=0 // pred_fallthru
    _
  // Predicated region
  $region34: #{cline_fea_extract_forward.9} parent=0 // pred_check
    _
  $region35: #{cline_fea_extract_forward.9} parent=0 // pred_check_branch
    %535 = sbr.rel (0) target = $region37
  $region36: #{cline_fea_extract_forward.9} parent=0 // pred_region
    _
  $region37: #{cline_fea_extract_forward.9} parent=0 // pred_fallthru
    _
  // Predicated region
  $region38: #{cline_fea_extract_forward.9} parent=0 // pred_check
    _
  $region39: #{cline_fea_extract_forward.9} parent=0 // pred_check_branch
    %537 = sbr.rel (0) target = $region41
  $region40: #{cline_fea_extract_forward.9} parent=0 // pred_region
    _
  $region41: #{cline_fea_extract_forward.9} parent=0 // pred_fallthru
    _
  // Predicated region
  $region42: #{cline_fea_extract_forward.9} parent=0 // pred_check
    _
  $region43: #{cline_fea_extract_forward.9} parent=0 // pred_check_branch
    %539 = sbr.rel (0) target = $region45
  $region44: #{cline_fea_extract_forward.9} parent=0 // pred_region
    _
  $region45: #{cline_fea_extract_forward.9} parent=0 // pred_fallthru
    _

// kernel: cline_fea_extract_forward.13
$region0: #{cline_fea_extract_forward.13}
  #allocation0 [shape = 'u32[]', space=smem, size = 0x4, offset = 0x4, fixed_abs, tag = 'smem constant byte address 0x4 - core index']
  #allocation1 [shape = 'u32[144,128]{1,0:T(1,128)}', space=vmem, size = 0x12000, scoped, tag = 'internal scratch']
  %s0 = inlined_call_operand.vmem [shape: bf16[128,128], index: 0, kind: input, shape index: {}]
  %s1 = inlined_call_operand.vmem [shape: bf16[128,128], index: 1, kind: input, shape index: {}]
  %s2 = inlined_call_operand.vmem [shape: f32[1,128], index: 2, kind: input, shape index: {}]
  %s3 = inlined_call_operand.vmem [shape: f32[128,128], index: 3, kind: output, shape index: {0}]
  %s4 = inlined_call_operand.hbm [shape: f32[1,1,128], index: 4, kind: output, shape index: {1}]
  %s5 = inlined_call_operand.hbm [shape: f32[1,1,128], index: 5, kind: output, shape index: {2}]
  %6 = xla_tuple %s3, %s4, %s5
  %s7 = sld [smem:[#allocation0]]
  $region46: #{cline_fea_extract_forward.13} parent=0
    _
  %s9 = ssub.s32 1, %s7
  %s10 = scalar_select 0, %s9, %s7
  $region1: #{cline_fea_extract_forward.13} parent=0
    #allocation2 [shape = 'u8[512]{0}', space=vmem, size = 0x400, scoped, tag = 'output window, operand 1, single buffered']
    #allocation3 [shape = 's32[1]{0}', space=sflag, size = 0x4, scoped, tag = 'scoped memory for cline_fea_extract_forward.13']
    #allocation4 [shape = 'u8[512]{0}', space=vmem, size = 0x400, scoped, tag = 'output window, operand 2, single buffered']
    #allocation5 [shape = 's32[1]{0}', space=sflag, size = 0x4, scoped, tag = 'scoped memory for cline_fea_extract_forward.13']
    %11 = vsyncpa [#allocation3], 0
    %12 = vsyncpa [#allocation5], 0
    // Predicated region
    $region2: #{cline_fea_extract_forward.13} parent=1 // pred_check
      _
    $region3: #{cline_fea_extract_forward.13} parent=1 // pred_check_branch
      %14 = sbr.rel (0) target = $region5
    $region4: #{cline_fea_extract_forward.13} parent=1 // pred_region
      _
    $region5: #{cline_fea_extract_forward.13} parent=1 // pred_fallthru
      _
    // Predicated region
    $region6: #{cline_fea_extract_forward.13} parent=1 // pred_check
      _
    $region7: #{cline_fea_extract_forward.13} parent=1 // pred_check_branch
      %16 = sbr.rel (0) target = $region9
    $region8: #{cline_fea_extract_forward.13} parent=1 // pred_region
      _
    $region9: #{cline_fea_extract_forward.13} parent=1 // pred_fallthru
      _
    // Predicated region
    $region10: #{cline_fea_extract_forward.13} parent=1 // pred_check
      _
    $region11: #{cline_fea_extract_forward.13} parent=1 // pred_check_branch
      %18 = sbr.rel (0) target = $region13
    $region12: #{cline_fea_extract_forward.13} parent=1 // pred_region
      _
    $region13: #{cline_fea_extract_forward.13} parent=1 // pred_fallthru
      _
    %s20 = smul.u32 0, 128
    %p21 = scmp.eq.s32.totalorder 0, 0
    // Predicated region
    $region14: #{cline_fea_extract_forward.13} parent=1 // pred_check
      %p22 = pneg %p21
    $region15: #{cline_fea_extract_forward.13} parent=1 // pred_check_branch
      %24 = sbr.rel (%p22) target = $region17
    $region16: #{cline_fea_extract_forward.13} parent=1 // pred_region
      %25 = vst [vmem:[%s3] sm:$0xff] 0.0
      %26 = vst [vmem:[%s3 + $0x8] sm:$0xff] 0.0
      %27 = vst [vmem:[%s3 + $0x10] sm:$0xff] 0.0
      %28 = vst [vmem:[%s3 + $0x18] sm:$0xff] 0.0
      %29 = vst [vmem:[%s3 + $0x20] sm:$0xff] 0.0
      %30 = vst [vmem:[%s3 + $0x28] sm:$0xff] 0.0
      %31 = vst [vmem:[%s3 + $0x30] sm:$0xff] 0.0
      %32 = vst [vmem:[%s3 + $0x38] sm:$0xff] 0.0
      %33 = vst [vmem:[%s3 + $0x40] sm:$0xff] 0.0
      %34 = vst [vmem:[%s3 + $0x48] sm:$0xff] 0.0
      %35 = vst [vmem:[%s3 + $0x50] sm:$0xff] 0.0
      %36 = vst [vmem:[%s3 + $0x58] sm:$0xff] 0.0
      %37 = vst [vmem:[%s3 + $0x60] sm:$0xff] 0.0
      %38 = vst [vmem:[%s3 + $0x68] sm:$0xff] 0.0
      %39 = vst [vmem:[%s3 + $0x70] sm:$0xff] 0.0
      %40 = vst [vmem:[%s3 + $0x78] sm:$0xff] 0.0
    $region17: #{cline_fea_extract_forward.13} parent=1 // pred_fallthru
      _
    %v41 = vld [vmem:[%s3] sm:$0xff]
    %v42 = vld [vmem:[%s3 + $0x8] sm:$0xff]
    %v43 = vld [vmem:[%s3 + $0x10] sm:$0xff]
    %v44 = vld [vmem:[%s3 + $0x18] sm:$0xff]
    %v45 = vld [vmem:[%s3 + $0x20] sm:$0xff]
    %v46 = vld [vmem:[%s3 + $0x28] sm:$0xff]
    %v47 = vld [vmem:[%s3 + $0x30] sm:$0xff]
    %v48 = vld [vmem:[%s3 + $0x38] sm:$0xff]
    %v49 = vld [vmem:[%s3 + $0x40] sm:$0xff]
    %v50 = vld [vmem:[%s3 + $0x48] sm:$0xff]
    %v51 = vld [vmem:[%s3 + $0x50] sm:$0xff]
    %v52 = vld [vmem:[%s3 + $0x58] sm:$0xff]
    %v53 = vld [vmem:[%s3 + $0x60] sm:$0xff]
    %v54 = vld [vmem:[%s3 + $0x68] sm:$0xff]
    %v55 = vld [vmem:[%s3 + $0x70] sm:$0xff]
    %v56 = vld [vmem:[%s3 + $0x78] sm:$0xff]
    %v57 = vld [vmem:[%s0] sm:$0xf]
    %v58 = vld [vmem:[%s0 + $0x4] sm:$0xf]
    %v59 = vld [vmem:[%s0 + $0x8] sm:$0xf]
    %v60 = vld [vmem:[%s0 + $0xc] sm:$0xf]
    %v61 = vld [vmem:[%s0 + $0x10] sm:$0xf]
    %v62 = vld [vmem:[%s0 + $0x14] sm:$0xf]
    %v63 = vld [vmem:[%s0 + $0x18] sm:$0xf]
    %v64 = vld [vmem:[%s0 + $0x1c] sm:$0xf]
    %v65 = vld [vmem:[%s0 + $0x20] sm:$0xf]
    %v66 = vld [vmem:[%s0 + $0x24] sm:$0xf]
    %v67 = vld [vmem:[%s0 + $0x28] sm:$0xf]
    %v68 = vld [vmem:[%s0 + $0x2c] sm:$0xf]
    %v69 = vld [vmem:[%s0 + $0x30] sm:$0xf]
    %v70 = vld [vmem:[%s0 + $0x34] sm:$0xf]
    %v71 = vld [vmem:[%s0 + $0x38] sm:$0xf]
    %v72 = vld [vmem:[%s0 + $0x3c] sm:$0xf]
    %v73 = vld [vmem:[%s1] sm:$0xf]
    %v74 = vld [vmem:[%s1 + $0x4] sm:$0xf]
    %v75 = vld [vmem:[%s1 + $0x8] sm:$0xf]
    %v76 = vld [vmem:[%s1 + $0xc] sm:$0xf]
    %v77 = vld [vmem:[%s1 + $0x10] sm:$0xf]
    %v78 = vld [vmem:[%s1 + $0x14] sm:$0xf]
    %v79 = vld [vmem:[%s1 + $0x18] sm:$0xf]
    %v80 = vld [vmem:[%s1 + $0x1c] sm:$0xf]
    %v81 = vld [vmem:[%s1 + $0x20] sm:$0xf]
    %v82 = vld [vmem:[%s1 + $0x24] sm:$0xf]
    %v83 = vld [vmem:[%s1 + $0x28] sm:$0xf]
    %v84 = vld [vmem:[%s1 + $0x2c] sm:$0xf]
    %v85 = vld [vmem:[%s1 + $0x30] sm:$0xf]
    %v86 = vld [vmem:[%s1 + $0x34] sm:$0xf]
    %v87 = vld [vmem:[%s1 + $0x38] sm:$0xf]
    %v88 = vld [vmem:[%s1 + $0x3c] sm:$0xf]
    %v105 = vunpack.c.l.b16 %v57
    %v106 = vunpack.c.l.b16 %v58
    %v107 = vunpack.c.l.b16 %v59
    %v108 = vunpack.c.l.b16 %v60
    %v109 = vunpack.c.l.b16 %v61
    %v110 = vunpack.c.l.b16 %v62
    %v111 = vunpack.c.l.b16 %v63
    %v112 = vunpack.c.l.b16 %v64
    %v113 = vunpack.c.l.b16 %v65
    %v114 = vunpack.c.l.b16 %v66
    %v115 = vunpack.c.l.b16 %v67
    %v116 = vunpack.c.l.b16 %v68
    %v117 = vunpack.c.l.b16 %v69
    %v118 = vunpack.c.l.b16 %v70
    %v119 = vunpack.c.l.b16 %v71
    %v120 = vunpack.c.l.b16 %v72
    %v121 = vpack.c.b16 %v106, %v105
    %v122 = vpack.c.b16 %v108, %v107
    %v123 = vpack.c.b16 %v110, %v109
    %v124 = vpack.c.b16 %v112, %v111
    %v125 = vpack.c.b16 %v114, %v113
    %v126 = vpack.c.b16 %v116, %v115
    %v127 = vpack.c.b16 %v118, %v117
    %v128 = vpack.c.b16 %v120, %v119
    %v153 = vunpack.c.l.b16 %v73
    %v154 = vunpack.c.l.b16 %v74
    %v155 = vunpack.c.l.b16 %v75
    %v156 = vunpack.c.l.b16 %v76
    %v157 = vunpack.c.l.b16 %v77
    %v158 = vunpack.c.l.b16 %v78
    %v159 = vunpack.c.l.b16 %v79
    %v160 = vunpack.c.l.b16 %v80
    %v161 = vunpack.c.l.b16 %v81
    %v162 = vunpack.c.l.b16 %v82
    %v163 = vunpack.c.l.b16 %v83
    %v164 = vunpack.c.l.b16 %v84
    %v165 = vunpack.c.l.b16 %v85
    %v166 = vunpack.c.l.b16 %v86
    %v167 = vunpack.c.l.b16 %v87
    %v168 = vunpack.c.l.b16 %v88
    %v169 = vpack.c.b16 %v154, %v153
    %v170 = vpack.c.b16 %v156, %v155
    %v171 = vpack.c.b16 %v158, %v157
    %v172 = vpack.c.b16 %v160, %v159
    %v173 = vpack.c.b16 %v162, %v161
    %v174 = vpack.c.b16 %v164, %v163
    %v175 = vpack.c.b16 %v166, %v165
    %v176 = vpack.c.b16 %v168, %v167
    %185 = vmatprep.subr.bf16.mxu0 0
    %186 = vmatpush1.bf16.msra.mxu0 %v169
    %187 = vmatprep.subr.bf16.mxu0 0
    %188 = vmatpush1.bf16.msra.mxu0 %v170
    %189 = vmatprep.subr.bf16.mxu0 0
    %190 = vmatpush1.bf16.msra.mxu0 %v171
    %191 = vmatprep.subr.bf16.mxu0 0
    %192 = vmatpush1.bf16.msra.mxu0 %v172
    %193 = vmatprep.subr.bf16.mxu0 0
    %194 = vmatpush1.bf16.msra.mxu0 %v173
    %195 = vmatprep.subr.bf16.mxu0 0
    %196 = vmatpush1.bf16.msra.mxu0 %v174
    %197 = vmatprep.subr.bf16.mxu0 0
    %198 = vmatpush1.bf16.msra.mxu0 %v175
    %199 = vmatprep.subr.bf16.mxu0 0
    %200 = vmatpush1.bf16.msra.mxu0 %v176
    %201 = vmatprep.subr.bf16.mxu0 0
    %202 = vmatpush1.bf16.msra.mxu0 0
    %203 = vmatprep.subr.bf16.mxu0 0
    %204 = vmatpush1.bf16.msra.mxu0 0
    %205 = vmatprep.subr.bf16.mxu0 0
    %206 = vmatpush1.bf16.msra.mxu0 0
    %207 = vmatprep.subr.bf16.mxu0 0
    %208 = vmatpush1.bf16.msra.mxu0 0
    %209 = vmatprep.subr.bf16.mxu0 0
    %210 = vmatpush1.bf16.msra.mxu0 0
    %211 = vmatprep.subr.bf16.mxu0 0
    %212 = vmatpush1.bf16.msra.mxu0 0
    %213 = vmatprep.subr.bf16.mxu0 0
    %214 = vmatpush1.bf16.msra.mxu0 0
    %215 = vmatprep.subr.bf16.mxu0 0
    %216 = vmatpush1.bf16.msra.mxu0 0
    %217 = vmatprep.mubr.bf16.mxu0 0
    %218 = vmatmul.mubr.bf16.gmra.mrb[0].mxu0 %v121
    %v219 = vpop.f32.mrb[0].mxu0
    %v220 = vadd.f32 0.0, %v219
    %v221 = vpop.f32.mrb[0].mxu0
    %v222 = vpop.f32.mrb[0].mxu0
    %v223 = vadd.f32 0.0, %v222
    %v224 = vpop.f32.mrb[0].mxu0
    %225 = vmatprep.mubr.bf16.mxu0 0
    %226 = vmatmul.mubr.bf16.gmra.mrb[0].mxu0 %v122
    %v227 = vpop.f32.mrb[0].mxu0
    %v228 = vadd.f32 0.0, %v227
    %v229 = vpop.f32.mrb[0].mxu0
    %v230 = vpop.f32.mrb[0].mxu0
    %v231 = vadd.f32 0.0, %v230
    %v232 = vpop.f32.mrb[0].mxu0
    %233 = vmatprep.mubr.bf16.mxu0 0
    %234 = vmatmul.mubr.bf16.gmra.mrb[0].mxu0 %v123
    %v235 = vpop.f32.mrb[0].mxu0
    %v236 = vadd.f32 0.0, %v235
    %v237 = vpop.f32.mrb[0].mxu0
    %v238 = vpop.f32.mrb[0].mxu0
    %v239 = vadd.f32 0.0, %v238
    %v240 = vpop.f32.mrb[0].mxu0
    %241 = vmatprep.mubr.bf16.mxu0 0
    %242 = vmatmul.mubr.bf16.gmra.mrb[0].mxu0 %v124
    %v243 = vpop.f32.mrb[0].mxu0
    %v244 = vadd.f32 0.0, %v243
    %v245 = vpop.f32.mrb[0].mxu0
    %v246 = vpop.f32.mrb[0].mxu0
    %v247 = vadd.f32 0.0, %v246
    %v248 = vpop.f32.mrb[0].mxu0
    %249 = vmatprep.mubr.bf16.mxu0 0
    %250 = vmatmul.mubr.bf16.gmra.mrb[0].mxu0 %v125
    %v251 = vpop.f32.mrb[0].mxu0
    %v252 = vadd.f32 0.0, %v251
    %v253 = vpop.f32.mrb[0].mxu0
    %v254 = vpop.f32.mrb[0].mxu0
    %v255 = vadd.f32 0.0, %v254
    %v256 = vpop.f32.mrb[0].mxu0
    %257 = vmatprep.mubr.bf16.mxu0 0
    %258 = vmatmul.mubr.bf16.gmra.mrb[0].mxu0 %v126
    %v259 = vpop.f32.mrb[0].mxu0
    %v260 = vadd.f32 0.0, %v259
    %v261 = vpop.f32.mrb[0].mxu0
    %v262 = vpop.f32.mrb[0].mxu0
    %v263 = vadd.f32 0.0, %v262
    %v264 = vpop.f32.mrb[0].mxu0
    %265 = vmatprep.mubr.bf16.mxu0 0
    %266 = vmatmul.mubr.bf16.gmra.mrb[0].mxu0 %v127
    %v267 = vpop.f32.mrb[0].mxu0
    %v268 = vadd.f32 0.0, %v267
    %v269 = vpop.f32.mrb[0].mxu0
    %v270 = vpop.f32.mrb[0].mxu0
    %v271 = vadd.f32 0.0, %v270
    %v272 = vpop.f32.mrb[0].mxu0
    %273 = vmatprep.mubr.bf16.mxu0 0
    %274 = vmatmul.mubr.bf16.gmra.mrb[0].mxu0 %v128
    %v275 = vpop.f32.mrb[0].mxu0
    %v276 = vadd.f32 0.0, %v275
    %v277 = vpop.f32.mrb[0].mxu0
    %v278 = vpop.f32.mrb[0].mxu0
    %v279 = vadd.f32 0.0, %v278
    %v280 = vpop.f32.mrb[0].mxu0
    %281 = vdwg.mxu0
    %v282 = vadd.f32 %v41, %v220
    %v283 = vadd.f32 %v42, %v223
    %v284 = vadd.f32 %v43, %v228
    %v285 = vadd.f32 %v44, %v231
    %v286 = vadd.f32 %v45, %v236
    %v287 = vadd.f32 %v46, %v239
    %v288 = vadd.f32 %v47, %v244
    %v289 = vadd.f32 %v48, %v247
    %v290 = vadd.f32 %v49, %v252
    %v291 = vadd.f32 %v50, %v255
    %v292 = vadd.f32 %v51, %v260
    %v293 = vadd.f32 %v52, %v263
    %v294 = vadd.f32 %v53, %v268
    %v295 = vadd.f32 %v54, %v271
    %v296 = vadd.f32 %v55, %v276
    %v297 = vadd.f32 %v56, %v279
    %298 = vst [vmem:[%s3] sm:$0xff] %v282
    %299 = vst [vmem:[%s3 + $0x8] sm:$0xff] %v283
    %300 = vst [vmem:[%s3 + $0x10] sm:$0xff] %v284
    %301 = vst [vmem:[%s3 + $0x18] sm:$0xff] %v285
    %302 = vst [vmem:[%s3 + $0x20] sm:$0xff] %v286
    %303 = vst [vmem:[%s3 + $0x28] sm:$0xff] %v287
    %304 = vst [vmem:[%s3 + $0x30] sm:$0xff] %v288
    %305 = vst [vmem:[%s3 + $0x38] sm:$0xff] %v289
    %306 = vst [vmem:[%s3 + $0x40] sm:$0xff] %v290
    %307 = vst [vmem:[%s3 + $0x48] sm:$0xff] %v291
    %308 = vst [vmem:[%s3 + $0x50] sm:$0xff] %v292
    %309 = vst [vmem:[%s3 + $0x58] sm:$0xff] %v293
    %310 = vst [vmem:[%s3 + $0x60] sm:$0xff] %v294
    %311 = vst [vmem:[%s3 + $0x68] sm:$0xff] %v295
    %312 = vst [vmem:[%s3 + $0x70] sm:$0xff] %v296
    %313 = vst [vmem:[%s3 + $0x78] sm:$0xff] %v297
    // Predicated region
    $region18: #{cline_fea_extract_forward.13} parent=1 // pred_check
      %p314 = pneg %p21
    $region19: #{cline_fea_extract_forward.13} parent=1 // pred_check_branch
      %316 = sbr.rel (%p314) target = $region21
    $region20: #{cline_fea_extract_forward.13} parent=1 // pred_region
      %v317 = vlaneseq
      %v318 = vshrl.u32 %v317, 7
      %v319 = vadd.s32 %v318, 8
      %v320 = vadd.s32 %v318, 16
      %v321 = vadd.s32 %v318, 24
      %v322 = vadd.s32 %v318, 32
      %v323 = vadd.s32 %v318, 40
      %v324 = vadd.s32 %v318, 48
      %v325 = vadd.s32 %v318, 56
      %v326 = vadd.s32 %v318, 64
      %v327 = vadd.s32 %v318, 72
      %v328 = vadd.s32 %v318, 80
      %v329 = vadd.s32 %v318, 88
      %v330 = vadd.s32 %v318, 96
      %v331 = vadd.s32 %v318, 104
      %v332 = vadd.s32 %v318, 112
      %v333 = vadd.s32 %v318, 120
      %v334 = vstv %s20
      %v335 = vadd.s32 %v334, %v318
      %v336 = vadd.s32 %v334, %v319
      %v337 = vadd.s32 %v334, %v320
      %v338 = vadd.s32 %v334, %v321
      %v339 = vadd.s32 %v334, %v322
      %v340 = vadd.s32 %v334, %v323
      %v341 = vadd.s32 %v334, %v324
      %v342 = vadd.s32 %v334, %v325
      %v343 = vadd.s32 %v334, %v326
      %v344 = vadd.s32 %v334, %v327
      %v345 = vadd.s32 %v334, %v328
      %v346 = vadd.s32 %v334, %v329
      %v347 = vadd.s32 %v334, %v330
      %v348 = vadd.s32 %v334, %v331
      %v349 = vadd.s32 %v334, %v332
      %v350 = vadd.s32 %v334, %v333
      %vm351 = vcmp.lt.s32.totalorder %v335, 16
      %vm352 = vcmp.lt.s32.totalorder %v336, 16
      %vm353 = vcmp.lt.s32.totalorder %v337, 16
      %vm354 = vcmp.lt.s32.totalorder %v338, 16
      %vm355 = vcmp.lt.s32.totalorder %v339, 16
      %vm356 = vcmp.lt.s32.totalorder %v340, 16
      %vm357 = vcmp.lt.s32.totalorder %v341, 16
      %vm358 = vcmp.lt.s32.totalorder %v342, 16
      %vm359 = vcmp.lt.s32.totalorder %v343, 16
      %vm360 = vcmp.lt.s32.totalorder %v344, 16
      %vm361 = vcmp.lt.s32.totalorder %v345, 16
      %vm362 = vcmp.lt.s32.totalorder %v346, 16
      %vm363 = vcmp.lt.s32.totalorder %v347, 16
      %vm364 = vcmp.lt.s32.totalorder %v348, 16
      %vm365 = vcmp.lt.s32.totalorder %v349, 16
      %vm366 = vcmp.lt.s32.totalorder %v350, 16
      %v367 = vld [vmem:[%s3] sm:$0xff]
      %v368 = vld [vmem:[%s3 + $0x8] sm:$0xff]
      %v369 = vld [vmem:[%s3 + $0x10] sm:$0xff]
      %v370 = vld [vmem:[%s3 + $0x18] sm:$0xff]
      %v371 = vld [vmem:[%s3 + $0x20] sm:$0xff]
      %v372 = vld [vmem:[%s3 + $0x28] sm:$0xff]
      %v373 = vld [vmem:[%s3 + $0x30] sm:$0xff]
      %v374 = vld [vmem:[%s3 + $0x38] sm:$0xff]
      %v375 = vld [vmem:[%s3 + $0x40] sm:$0xff]
      %v376 = vld [vmem:[%s3 + $0x48] sm:$0xff]
      %v377 = vld [vmem:[%s3 + $0x50] sm:$0xff]
      %v378 = vld [vmem:[%s3 + $0x58] sm:$0xff]
      %v379 = vld [vmem:[%s3 + $0x60] sm:$0xff]
      %v380 = vld [vmem:[%s3 + $0x68] sm:$0xff]
      %v381 = vld [vmem:[%s3 + $0x70] sm:$0xff]
      %v382 = vld [vmem:[%s3 + $0x78] sm:$0xff]
      %v383 = vld [vmem:[%s2] sm:$0x1]
      %v385 = vlaneseq
      %v386 = vshrl.u32 %v385, 7
      %v387 = vsub.s32 0, %v386
      %v388 = vrot.slane %v383, %v387
      %v390 = vadd.f32 %v367, %v388
      %v391 = vadd.f32 %v368, %v388
      %v392 = vadd.f32 %v369, %v388
      %v393 = vadd.f32 %v370, %v388
      %v394 = vadd.f32 %v371, %v388
      %v395 = vadd.f32 %v372, %v388
      %v396 = vadd.f32 %v373, %v388
      %v397 = vadd.f32 %v374, %v388
      %v398 = vadd.f32 %v375, %v388
      %v399 = vadd.f32 %v376, %v388
      %v400 = vadd.f32 %v377, %v388
      %v401 = vadd.f32 %v378, %v388
      %v402 = vadd.f32 %v379, %v388
      %v403 = vadd.f32 %v380, %v388
      %v404 = vadd.f32 %v381, %v388
      %v405 = vadd.f32 %v382, %v388
      %v406 = vsel %vm351, 1, 0
      %v407 = vsel %vm352, 1, 0
      %v408 = vsel %vm353, 1, 0
      %v409 = vsel %vm354, 1, 0
      %v410 = vsel %vm355, 1, 0
      %v411 = vsel %vm356, 1, 0
      %v412 = vsel %vm357, 1, 0
      %v413 = vsel %vm358, 1, 0
      %v414 = vsel %vm359, 1, 0
      %v415 = vsel %vm360, 1, 0
      %v416 = vsel %vm361, 1, 0
      %v417 = vsel %vm362, 1, 0
      %v418 = vsel %vm363, 1, 0
      %v419 = vsel %vm364, 1, 0
      %v420 = vsel %vm365, 1, 0
      %v421 = vsel %vm366, 1, 0
      %vm422 = vcmp.eq.s32.totalorder %v406, 1
      %vm423 = vcmp.eq.s32.totalorder %v407, 1
      %vm424 = vcmp.eq.s32.totalorder %v408, 1
      %vm425 = vcmp.eq.s32.totalorder %v409, 1
      %vm426 = vcmp.eq.s32.totalorder %v410, 1
      %vm427 = vcmp.eq.s32.totalorder %v411, 1
      %vm428 = vcmp.eq.s32.totalorder %v412, 1
      %vm429 = vcmp.eq.s32.totalorder %v413, 1
      %vm430 = vcmp.eq.s32.totalorder %v414, 1
      %vm431 = vcmp.eq.s32.totalorder %v415, 1
      %vm432 = vcmp.eq.s32.totalorder %v416, 1
      %vm433 = vcmp.eq.s32.totalorder %v417, 1
      %vm434 = vcmp.eq.s32.totalorder %v418, 1
      %vm435 = vcmp.eq.s32.totalorder %v419, 1
      %vm436 = vcmp.eq.s32.totalorder %v420, 1
      %vm437 = vcmp.eq.s32.totalorder %v421, 1
      %v438 = vsel %vm422, %v390, 0.0
      %v439 = vsel %vm423, %v391, 0.0
      %v440 = vsel %vm424, %v392, 0.0
      %v441 = vsel %vm425, %v393, 0.0
      %v442 = vsel %vm426, %v394, 0.0
      %v443 = vsel %vm427, %v395, 0.0
      %v444 = vsel %vm428, %v396, 0.0
      %v445 = vsel %vm429, %v397, 0.0
      %v446 = vsel %vm430, %v398, 0.0
      %v447 = vsel %vm431, %v399, 0.0
      %v448 = vsel %vm432, %v400, 0.0
      %v449 = vsel %vm433, %v401, 0.0
      %v450 = vsel %vm434, %v402, 0.0
      %v451 = vsel %vm435, %v403, 0.0
      %v452 = vsel %vm436, %v404, 0.0
      %v453 = vsel %vm437, %v405, 0.0
      %454 = vst [vmem:[%s3] sm:$0xff] %v438
      %455 = vst [vmem:[%s3 + $0x8] sm:$0xff] %v439
      %456 = vst [vmem:[%s3 + $0x10] sm:$0xff] %v440
      %457 = vst [vmem:[%s3 + $0x18] sm:$0xff] %v441
      %458 = vst [vmem:[%s3 + $0x20] sm:$0xff] %v442
      %459 = vst [vmem:[%s3 + $0x28] sm:$0xff] %v443
      %460 = vst [vmem:[%s3 + $0x30] sm:$0xff] %v444
      %461 = vst [vmem:[%s3 + $0x38] sm:$0xff] %v445
      %462 = vst [vmem:[%s3 + $0x40] sm:$0xff] %v446
      %463 = vst [vmem:[%s3 + $0x48] sm:$0xff] %v447
      %464 = vst [vmem:[%s3 + $0x50] sm:$0xff] %v448
      %465 = vst [vmem:[%s3 + $0x58] sm:$0xff] %v449
      %466 = vst [vmem:[%s3 + $0x60] sm:$0xff] %v450
      %467 = vst [vmem:[%s3 + $0x68] sm:$0xff] %v451
      %468 = vst [vmem:[%s3 + $0x70] sm:$0xff] %v452
      %469 = vst [vmem:[%s3 + $0x78] sm:$0xff] %v453
      %v470 = vadd.f32 %v438, %v439
      %v471 = vadd.f32 %v470, %v440
      %v472 = vadd.f32 %v471, %v441
      %v473 = vadd.f32 %v472, %v442
      %v474 = vadd.f32 %v473, %v443
      %v475 = vadd.f32 %v474, %v444
      %v476 = vadd.f32 %v475, %v445
      %v477 = vadd.f32 %v476, %v446
      %v478 = vadd.f32 %v477, %v447
      %v479 = vadd.f32 %v478, %v448
      %v480 = vadd.f32 %v479, %v449
      %v481 = vadd.f32 %v480, %v450
      %v482 = vadd.f32 %v481, %v451
      %v483 = vadd.f32 %v482, %v452
      %v484 = vadd.f32 %v483, %v453
      %v485 = vrot.slane %v484, 4
      %v486 = vadd.f32 %v484, %v485
      %v487 = vrot.slane %v486, 2
      %v488 = vadd.f32 %v486, %v487
      %v489 = vrot.slane %v488, 1
      %v490 = vadd.f32 %v488, %v489
      %491 = vst [vmem:[#allocation2] sm:$0x1] %v490
      %v492 = vmul.f32 %v438, %v438
      %v493 = vmul.f32 %v439, %v439
      %v494 = vmul.f32 %v440, %v440
      %v495 = vmul.f32 %v441, %v441
      %v496 = vmul.f32 %v442, %v442
      %v497 = vmul.f32 %v443, %v443
      %v498 = vmul.f32 %v444, %v444
      %v499 = vmul.f32 %v445, %v445
      %v500 = vmul.f32 %v446, %v446
      %v501 = vmul.f32 %v447, %v447
      %v502 = vmul.f32 %v448, %v448
      %v503 = vmul.f32 %v449, %v449
      %v504 = vmul.f32 %v450, %v450
      %v505 = vmul.f32 %v451, %v451
      %v506 = vmul.f32 %v452, %v452
      %v507 = vmul.f32 %v453, %v453
      %v508 = vadd.f32 %v492, %v493
      %v509 = vadd.f32 %v508, %v494
      %v510 = vadd.f32 %v509, %v495
      %v511 = vadd.f32 %v510, %v496
      %v512 = vadd.f32 %v511, %v497
      %v513 = vadd.f32 %v512, %v498
      %v514 = vadd.f32 %v513, %v499
      %v515 = vadd.f32 %v514, %v500
      %v516 = vadd.f32 %v515, %v501
      %v517 = vadd.f32 %v516, %v502
      %v518 = vadd.f32 %v517, %v503
      %v519 = vadd.f32 %v518, %v504
      %v520 = vadd.f32 %v519, %v505
      %v521 = vadd.f32 %v520, %v506
      %v522 = vadd.f32 %v521, %v507
      %v523 = vrot.slane %v522, 4
      %v524 = vadd.f32 %v522, %v523
      %v525 = vrot.slane %v524, 2
      %v526 = vadd.f32 %v524, %v525
      %v527 = vrot.slane %v526, 1
      %v528 = vadd.f32 %v526, %v527
      %529 = vst [vmem:[#allocation4] sm:$0x1] %v528
    $region21: #{cline_fea_extract_forward.13} parent=1 // pred_fallthru
      _
    // Predicated region
    $region22: #{cline_fea_extract_forward.13} parent=1 // pred_check
      _
    $region23: #{cline_fea_extract_forward.13} parent=1 // pred_check_branch
      %531 = sbr.rel (0) target = $region25
    $region24: #{cline_fea_extract_forward.13} parent=1 // pred_region
      _
    $region25: #{cline_fea_extract_forward.13} parent=1 // pred_fallthru
      _
    // Predicated region
    $region26: #{cline_fea_extract_forward.13} parent=1 // pred_check
      _
    $region27: #{cline_fea_extract_forward.13} parent=1 // pred_check_branch
      %533 = sbr.rel (0) target = $region29
    $region28: #{cline_fea_extract_forward.13} parent=1 // pred_region
      %s535 = ssub.s32 16, 16
      %536 = vsyncadd [#allocation3], %s535
      %s538 = sshll.u32 [#allocation2], 4
      %s539 = int_to_ptr.vmem [resolvable:$true] %s538
      %541 = dma.vmem_to_hbm [thread:$0]  %s539, 16, %s4, [#allocation3]
    $region29: #{cline_fea_extract_forward.13} parent=1 // pred_fallthru
      _
    // Predicated region
    $region30: #{cline_fea_extract_forward.13} parent=1 // pred_check
      _
    $region31: #{cline_fea_extract_forward.13} parent=1 // pred_check_branch
      %543 = sbr.rel (0) target = $region33
    $region32: #{cline_fea_extract_forward.13} parent=1 // pred_region
      %s545 = ssub.s32 16, 16
      %546 = vsyncadd [#allocation5], %s545
      %s548 = sshll.u32 [#allocation4], 4
      %s549 = int_to_ptr.vmem [resolvable:$true] %s548
      %551 = dma.vmem_to_hbm [thread:$0]  %s549, 16, %s5, [#allocation5]
    $region33: #{cline_fea_extract_forward.13} parent=1 // pred_fallthru
      _
    // Predicated region
    $region34: #{cline_fea_extract_forward.13} parent=1 // pred_check
      _
    $region35: #{cline_fea_extract_forward.13} parent=1 // pred_check_branch
      %553 = sbr.rel (0) target = $region37
    $region36: #{cline_fea_extract_forward.13} parent=1 // pred_region
      _
    $region37: #{cline_fea_extract_forward.13} parent=1 // pred_fallthru
      _
    // Predicated region
    $region38: #{cline_fea_extract_forward.13} parent=1 // pred_check
      _
    $region39: #{cline_fea_extract_forward.13} parent=1 // pred_check_branch
      %555 = sbr.rel (0) target = $region41
    $region40: #{cline_fea_extract_forward.13} parent=1 // pred_region
      %556 = dma.done [#allocation3], 16
    $region41: #{cline_fea_extract_forward.13} parent=1 // pred_fallthru
      _
    // Predicated region
    $region42: #{cline_fea_extract_forward.13} parent=1 // pred_check
      _
    $region43: #{cline_fea_extract_forward.13} parent=1 // pred_check_branch
      %558 = sbr.rel (0) target = $region45
    $region44: #{cline_fea_extract_forward.13} parent=1 // pred_region
      %559 = dma.done [#allocation5], 16
    $region45: #{cline_fea_extract_forward.13} parent=1 // pred_fallthru
      _
    %560 = vsyncpa [#allocation3], 1
    %561 = vsyncpa [#allocation5], 1

</llo_original>
